<compile_context>
chip_gen: v7x
topology: tpu7x:2x2x1
jax: 0.10.0
libtpu: 0.0.40
codegen_flags: <defaults>
</compile_context>

<pallas_src>
import functools

import jax
import jax.numpy as jnp
from jax.experimental import pallas as pl
from jax.experimental.pallas import tpu as pltpu


# ----------------------------------------------------------------------------
# Precision / hardware configuration.
# ----------------------------------------------------------------------------
_EXACT_F32 = False                       # set True for full-f32 PyTorch parity
_ON_TPU = jax.default_backend() == "tpu"

# Storage dtype for streamed tensors (K, values, folded weights, q).
_STORE_DTYPE = jnp.float32 if _EXACT_F32 else jnp.bfloat16
# MXU operand dtype: bf16 on real TPU (f32 accumulation), f32 elsewhere so the
# dots are supported on any backend (fixes the BF16xBF16=F32 DotThunk error).
_MXU_DTYPE = jnp.bfloat16 if (_ON_TPU and not _EXACT_F32) else jnp.float32


def _vmem_capacity_bytes():
    if _ON_TPU:
        try:
            return int(getattr(pltpu.get_tpu_info(), "vmem_capacity_bytes",
                               128 * 1024 * 1024))
        except Exception:
            pass
    return 128 * 1024 * 1024


def _default_probe_tile():
    if not _ON_TPU:
        return 256
    try:
        kind = jax.devices()[0].device_kind.lower()
    except Exception:
        return 256
    # v5e MXU is 128x128 -> 256-wide probe tiles just double passes.
    return 128 if ("v5 lite" in kind or "v5e" in kind or "v5lite" in kind) else 256


_VMEM_CAP = _vmem_capacity_bytes()
_VMEM_LIMIT = (3 * _VMEM_CAP) // 4            # 48 MiB on v7x, 96 MiB on 128-MiB parts
_M_TILE = 512 if _VMEM_CAP <= 96 * 1024 * 1024 else 1024
_SELF_BUDGET = _VMEM_LIMIT // 4               # ~12 MiB (v7x) / ~24 MiB (v5e/v6e)
_CROSS_BUDGET = _VMEM_LIMIT // 3              # ~16 MiB (v7x) / ~32 MiB (v5e/v6e)
_PROBE_TILE = _default_probe_tile()


def _mx(a):
    return a.astype(_MXU_DTYPE)


def _cparams(*sem):
    return pltpu.CompilerParams(dimension_semantics=sem,
                                vmem_limit_bytes=_VMEM_LIMIT)


def _softmax_recip(s):
    # EUP approx reciprocal on TPU (frees VALU slots); exact divide elsewhere.
    return pl.reciprocal(s, approx=True) if _ON_TPU else 1.0 / s


def _tile(n, target):
    """Sublane-safe tile: <= target, divides n, multiple of 8 — else full n."""
    target = max(1, int(target))
    if n <= target:
        return n
    t = (target // 8) * 8
    while t >= 8:
        if n % t == 0:
            return t
        t -= 8
    return n


def _tile_any(n, target):
    """Largest divisor of n that is <= target (for unconstrained leading dims)."""
    t = max(1, min(n, int(target)))
    while n % t:
        t -= 1
    return t


# ----------------------------------------------------------------------------
# Kernel A: fused feat_fc = Linear + folded BatchNorm1d (eval), tiled over M.
# Emits bf16 so downstream pooling kernels stream half the bytes.
# ----------------------------------------------------------------------------
def _linear_fc_kernel(x_ref, w_ref, b_ref, o_ref):
    y = jnp.dot(_mx(x_ref[...]), _mx(w_ref[...]),
                preferred_element_type=jnp.float32)
    o_ref[...] = (y + b_ref[...]).astype(o_ref.dtype)


def linear_fc(x2d, w_fc, b_fc, *, m_tile=None):
    m_tile = _M_TILE if m_tile is None else m_tile
    M, Din = x2d.shape
    Do = w_fc.shape[1]
    TM = _tile(M, m_tile)
    return pl.pallas_call(
        _linear_fc_kernel,
        out_shape=jax.ShapeDtypeStruct((M, Do), _STORE_DTYPE),
        grid=(M // TM,),
        in_specs=[
            pl.BlockSpec((TM, Din), lambda i: (i, 0)),
            pl.BlockSpec((Din, Do), lambda i: (0, 0)),   # bf16 weights resident
            pl.BlockSpec((1, Do), lambda i: (0, 0)),
        ],
        out_specs=pl.BlockSpec((TM, Do), lambda i: (i, 0)),
        compiler_params=_cparams("parallel"),
    )(x2d, w_fc, b_fc)


# ----------------------------------------------------------------------------
# Kernel B: SelfPoolingDir hot path, batched over TN samples per grid step.
# All reductions ride the MXU; the feat_fc(pooled) query projection is fused
# in as a second output ("hidden" output of the module is unused -> dropped).
# ----------------------------------------------------------------------------
def _self_pool_kernel(x_ref, k_ref, w_ref, b_ref, o_ref, q_ref):
    k = k_ref[...].astype(jnp.float32)                     # (TN, S, Do)
    h = jnp.mean(k, axis=1)                                # (TN, Do) == hidden
    # logits[n, s] = <H[n], K[n, s]>   — batched MXU matvec (M=1 row per sample)
    logits = jax.lax.dot_general(
        _mx(h)[:, None, :], _mx(k),
        (((2,), (2,)), ((0,), (0,))),
        preferred_element_type=jnp.float32)[:, 0, :]       # (TN, S)
    m = jnp.max(logits, axis=-1, keepdims=True)
    e = jnp.exp(logits - m)
    w = e * _softmax_recip(jnp.sum(e, axis=-1, keepdims=True))
    # pooled[n, d] = sum_s w[n, s] * x[n, s, d]  — batched MXU contraction
    pooled = jax.lax.dot_general(
        _mx(w)[:, None, :], _mx(x_ref[...]),
        (((2,), (1,)), ((0,), (0,))),
        preferred_element_type=jnp.float32)[:, 0, :]       # (TN, Dv)
    o_ref[...] = pooled
    # Fused feat_fc(pooled): the query projection used by the cross pooling.
    q = jnp.dot(_mx(pooled), _mx(w_ref[...]),
                preferred_element_type=jnp.float32) + b_ref[...]
    q_ref[...] = q.astype(q_ref.dtype)


def self_pool(x, k3, w_fc, b_fc, *, vmem_budget=None):
    vmem_budget = _SELF_BUDGET if vmem_budget is None else vmem_budget
    N, S, Dv = x.shape
    Do = k3.shape[-1]
    resident = 4 * Dv * Do + 8 * Do                    # bf16 W (dbl-buffered) + bias
    per_n = 8 * S * (Dv + Do) + 8 * Dv + 8 * Do        # bf16 streams + f32 temps/outs
    TN = _tile(N, max(8, (vmem_budget - resident) // per_n))
    return pl.pallas_call(
        _self_pool_kernel,
        out_shape=(jax.ShapeDtypeStruct((N, Dv), jnp.float32),
                   jax.ShapeDtypeStruct((N, Do), _STORE_DTYPE)),
        grid=(N // TN,),
        in_specs=[
            pl.BlockSpec((TN, S, Dv), lambda i: (i, 0, 0)),
            pl.BlockSpec((TN, S, Do), lambda i: (i, 0, 0)),
            pl.BlockSpec((Dv, Do), lambda i: (0, 0)),      # W resident
            pl.BlockSpec((1, Do), lambda i: (0, 0)),       # bias resident
        ],
        out_specs=(pl.BlockSpec((TN, Dv), lambda i: (i, 0)),
                   pl.BlockSpec((TN, Do), lambda i: (i, 0))),
        compiler_params=_cparams("parallel"),
    )(x, k3, w_fc, b_fc)


# ----------------------------------------------------------------------------
# Kernel C: CrossPoolingDir hot path.
# Grid = (value/gallery tiles OUTER, query tiles INNER): the big value/key
# blocks are DMA'd once and stay resident across the inner query sweep; only
# the small Q tile streams.  The probe/gallery half is selected with a
# squeezed block axis (no host-side slice copy).  Output is written directly
# in the layout the caller needs (no XLA transpose).
# ----------------------------------------------------------------------------
def _cross_pool_kernel(q_ref, xv_ref, kv_ref, o_ref, *, query_major):
    TG, S, Do = kv_ref.shape
    q = _mx(q_ref[...])                                    # (TP, Do)
    kg = _mx(kv_ref[...]).reshape(TG * S, Do)
    # logits[(g,s), p] = <K[g,s], Q[p]> — one MXU matmul, lane dim = TP.
    logits = jax.lax.dot_general(
        kg, q, (((1,), (1,)), ((), ())),
        preferred_element_type=jnp.float32).reshape(TG, S, -1)   # (TG, S, TP)
    m = jnp.max(logits, axis=1, keepdims=True)
    e = jnp.exp(logits - m)
    w = e * _softmax_recip(jnp.sum(e, axis=1, keepdims=True))    # softmax over seq
    # pooled[g, p, d] = sum_s w[g,s,p] * x[g,s,d] — batched MXU matmul over g.
    pooled = jax.lax.dot_general(
        _mx(w), _mx(xv_ref[...]),
        (((1,), (1,)), ((0,), (0,))),
        preferred_element_type=jnp.float32)                      # (TG, TP, Dv)
    if query_major:
        o_ref[...] = jnp.swapaxes(pooled, 0, 1)                  # (TP, TG, Dv) in VMEM
    else:
        o_ref[...] = pooled


def cross_pool(q, x_all, k_all, *, v_part, query_major,
               probe_tile=None, vmem_budget=None):
    """q: (Nq, Do); x_all: (Nv, 2, S, Dv); k_all: (Nv, 2, S, Do).

    Uses part `v_part` (0=probe, 1=gallery) of x_all/k_all as values/keys.
    Returns (Nq, Nv, Dv) if query_major else (Nv, Nq, Dv), float32.
    """
    probe_tile = _PROBE_TILE if probe_tile is None else probe_tile
    vmem_budget = _CROSS_BUDGET if vmem_budget is None else vmem_budget
    Nq, Do = q.shape
    Nv, _, S, Dv = x_all.shape
    TP = _tile(Nq, probe_tile)
    per_g = (4 * S * (Dv + Do)      # resident bf16 value/key tiles (double-buffered)
             + 2 * S * Do           # reshape/cast temp
             + 16 * TP * Dv         # f32 out tile (dbl) + pooled/transpose temps
             + 10 * S * TP)         # f32 logits/exp/w + bf16 w copy
    if query_major:
        # TG lands in the sublane position of the output block -> 8-safe.
        TG = _tile(Nv, max(8, vmem_budget // per_g))
        out_shape = jax.ShapeDtypeStruct((Nq, Nv, Dv), jnp.float32)
        out_spec = pl.BlockSpec((TP, TG, Dv), lambda gi, pi: (pi, gi, 0))
    else:
        TG = _tile_any(Nv, max(1, vmem_budget // per_g))
        out_shape = jax.ShapeDtypeStruct((Nv, Nq, Dv), jnp.float32)
        out_spec = pl.BlockSpec((TG, TP, Dv), lambda gi, pi: (gi, pi, 0))

    kern = functools.partial(_cross_pool_kernel, query_major=query_major)
    return pl.pallas_call(
        kern,
        out_shape=out_shape,
        grid=(Nv // TG, Nq // TP),          # value/gallery OUTER, query INNER
        in_specs=[
            pl.BlockSpec((TP, Do), lambda gi, pi: (pi, 0)),              # Q streams
            pl.BlockSpec((TG, None, S, Dv),
                         lambda gi, pi: (gi, v_part, 0, 0)),             # values resident
            pl.BlockSpec((TG, None, S, Do),
                         lambda gi, pi: (gi, v_part, 0, 0)),             # keys resident
        ],
        out_specs=out_spec,
        compiler_params=_cparams("parallel", "parallel"),
    )(q, x_all, k_all)


# ----------------------------------------------------------------------------
# AttModuleDir.forward
# ----------------------------------------------------------------------------
def attmodule_dir_forward(x, inputs, W, b, scale, shift):
    sample_num, seq_len, dval = x.shape
    if sample_num % 2 != 0:
        raise RuntimeError("the batch size should be even number!")
    n = sample_num // 2
    din = inputs.shape[-1]
    dout = W.shape[1]

    # Fold BatchNorm1d (eval mode) into the Linear; store weights/values in bf16.
    w_fc = (W * scale).astype(_STORE_DTYPE)                 # (Din, Do)
    b_fc = (b * scale + shift).astype(jnp.float32)          # (1, Do)
    xs = x.astype(_STORE_DTYPE)                             # values, bf16

    # Single merged K projection over ALL probe+gallery base features (bf16 out).
    K3 = linear_fc(inputs.reshape(sample_num * seq_len, din), w_fc, b_fc
                   ).reshape(sample_num, seq_len, dout)

    # Batched self pooling (+ fused feat_fc(pooled) query projection).
    pooled_all, q_all = self_pool(xs, K3, w_fc, b_fc)       # (N, Dv) f32, (N, Do) bf16

    pooled4 = pooled_all.reshape(n, 2, dval)
    q4 = q_all.reshape(n, 2, dout)
    x4 = xs.reshape(n, 2, seq_len, dval)                    # free (no copies)
    K4 = K3.reshape(n, 2, seq_len, dout)

    pooled_probe, pooled_gallery = pooled4[:, 0], pooled4[:, 1]
    q_probe, q_gallery = q4[:, 0], q4[:, 1]                 # tiny slices

    # Cross pooling: both outputs emitted in their final layout.
    #   pooled_gallery_2[p, g, d] : probe queries vs gallery values.
    #   pooled_probe_2 [p, g, d]  : gallery queries vs probe values (permuted).
    pooled_gallery_2 = cross_pool(q_probe, x4, K4, v_part=1, query_major=True)
    pooled_probe_2 = cross_pool(q_gallery, x4, K4, v_part=0, query_major=False)

    return (pooled_probe[:, None, :], pooled_gallery_2,
            pooled_probe_2, pooled_gallery[None, :, :])


# ----------------------------------------------------------------------------
# Pure-JAX reference (same math and the same storage/MXU dtypes) for checking.
# ----------------------------------------------------------------------------
def ref_forward(x, inputs, W, b, scale, shift):
    N, S, Dv = x.shape
    n = N // 2
    w_fc = (W * scale).astype(_STORE_DTYPE)
    b_fc = (b * scale + shift).astype(jnp.float32)
    xs = x.astype(_STORE_DTYPE)

    K = (jnp.dot(_mx(inputs.reshape(-1, inputs.shape[-1])), _mx(w_fc),
                 preferred_element_type=jnp.float32) + b_fc).astype(_STORE_DTYPE)
    K3 = K.reshape(N, S, -1)

    kf = K3.astype(jnp.float32)
    h = kf.mean(axis=1)
    logits = jnp.einsum("nd,nsd->ns", _mx(h), _mx(kf),
                        preferred_element_type=jnp.float32)
    w = jax.nn.softmax(logits, axis=-1)
    pooled_all = jnp.einsum("ns,nsd->nd", _mx(w), _mx(xs),
                            preferred_element_type=jnp.float32)
    q_all = (jnp.dot(_mx(pooled_all), _mx(w_fc),
                     preferred_element_type=jnp.float32) + b_fc).astype(_STORE_DTYPE)

    pooled4 = pooled_all.reshape(n, 2, Dv)
    q4 = q_all.reshape(n, 2, -1)
    x4 = xs.reshape(n, 2, S, Dv)
    K4 = K3.reshape(n, 2, S, -1)

    def crosspool(q, xv, kv):                       # -> (query, value, d)
        lg = jnp.einsum("pd,gsd->pgs", _mx(q), _mx(kv),
                        preferred_element_type=jnp.float32)
        wgt = jax.nn.softmax(lg, axis=-1)
        return jnp.einsum("pgs,gsd->pgd", _mx(wgt), _mx(xv),
                          preferred_element_type=jnp.float32)

    pooled_probe, pooled_gallery = pooled4[:, 0], pooled4[:, 1]
    pg2 = crosspool(q4[:, 0], x4[:, 1], K4[:, 1])                          # (p, g, d)
    pp2 = jnp.transpose(crosspool(q4[:, 1], x4[:, 0], K4[:, 0]), (1, 0, 2))  # (p, g, d)
    return (pooled_probe[:, None, :], pg2, pp2, pooled_gallery[None, :, :])


if __name__ == "__main__":
    key = jax.random.PRNGKey(0)
    sample_num, seq_len = 4, 8            # batch must be even: 2 probe/gallery pairs
    input_num, output_num = 128, 128      # lane-aligned feature dims

    k1, k2, k3 = jax.random.split(key, 3)
    x = jax.random.normal(k1, (sample_num, seq_len, input_num), jnp.float32)
    inputs = jax.random.normal(k2, (sample_num, seq_len, input_num), jnp.float32)

    # feat_fc parameters (mirroring the module __init__):
    #   Linear: kaiming_normal(fan_out) -> std = sqrt(2/output_num); bias = 0
    #   BatchNorm1d (eval): weight=1, bias=0, running_mean=0, running_var=1, eps=1e-5
    W = jax.random.normal(k3, (input_num, output_num), jnp.float32) * jnp.sqrt(2.0 / output_num)
    b = jnp.zeros((1, output_num), jnp.float32)
    gamma = jnp.ones((1, output_num), jnp.float32)
    beta = jnp.zeros((1, output_num), jnp.float32)
    running_mean = jnp.zeros((1, output_num), jnp.float32)
    running_var = jnp.ones((1, output_num), jnp.float32)
    eps = 1e-5
    scale = gamma / jnp.sqrt(running_var + eps)
    shift = beta - running_mean * scale

    fwd = jax.jit(attmodule_dir_forward)
    outs = jax.block_until_ready(fwd(x, inputs, W, b, scale, shift))

    refs = jax.block_until_ready(jax.jit(ref_forward)(x, inputs, W, b, scale, shift))
    names = ("pooled_probe", "pooled_gallery_2", "pooled_probe_2", "pooled_gallery")
    for nm, o, r in zip(names, outs, refs):
        assert o.shape == r.shape, (nm, o.shape, r.shape)
        err = float(jnp.max(jnp.abs(o - r)))
        assert err < 1e-2, (nm, err)

    print("KERNEL_OK")
</pallas_src>

<mosaic_0001>
module attributes {stable_mosaic.version = 11 : i64} {
  func.func @_linear_fc_kernel(%arg0: i32, %arg1: memref<32x128xf32, #tpu.memory_space<vmem>>, %arg2: memref<128x128xbf16, #tpu.memory_space<vmem>>, %arg3: memref<1x128xf32, #tpu.memory_space<vmem>>, %arg4: memref<32x128xbf16, #tpu.memory_space<vmem>>) attributes {dimension_semantics = [#tpu.dimension_semantics<parallel>], iteration_bounds = array<i64: 1>, scalar_prefetch = 0 : i64, scratch_operands = 0 : i64, tpu.core_type = #tpu.core_type<tc>, window_params = [{transform_indices = @transform_0, window_bounds = array<i64: 32, 128>}, {pipeline_mode = #tpu.pipeline_mode<synchronous>, transform_indices = @transform_1, window_bounds = array<i64: 128, 128>}, {pipeline_mode = #tpu.pipeline_mode<synchronous>, transform_indices = @transform_2, window_bounds = array<i64: 1, 128>}, {transform_indices = @transform_3, window_bounds = array<i64: 32, 128>}]} {
    %c0 = arith.constant 0 : index
    %c0_0 = arith.constant 0 : index
    %0 = vector.load %arg1[%c0, %c0_0] : memref<32x128xf32, #tpu.memory_space<vmem>>, vector<32x128xf32>
    %c0_1 = arith.constant 0 : index
    %c0_2 = arith.constant 0 : index
    %1 = vector.load %arg2[%c0_1, %c0_2] : memref<128x128xbf16, #tpu.memory_space<vmem>>, vector<128x128xbf16>
    %2 = arith.extf %1 : vector<128x128xbf16> to vector<128x128xf32>
    %cst = arith.constant dense<0.000000e+00> : vector<32x128xf32>
    %3 = tpu.matmul %0, %2, %cst {dimension_numbers = #tpu.dot_dimension_numbers<[1], [0], [0], [1], [0, 0, 1, 1], [], []>} : vector<32x128xf32>, vector<128x128xf32>, vector<32x128xf32> -> vector<32x128xf32>
    %c0_3 = arith.constant 0 : index
    %c0_4 = arith.constant 0 : index
    %4 = vector.load %arg3[%c0_3, %c0_4] : memref<1x128xf32, #tpu.memory_space<vmem>>, vector<1x128xf32>
    %5 = vector.broadcast %4 : vector<1x128xf32> to vector<32x128xf32>
    %6 = arith.addf %3, %5 : vector<32x128xf32>
    %7 = arith.truncf %6 : vector<32x128xf32> to vector<32x128xbf16>
    %c0_5 = arith.constant 0 : index
    %c0_6 = arith.constant 0 : index
    %8 = vector.load %arg4[%c0_5, %c0_6] : memref<32x128xbf16, #tpu.memory_space<vmem>>, vector<32x128xbf16>
    tpu.vector_store %arg4[%c0_5, %c0_6], %7 {strides = array<i32>} : memref<32x128xbf16, #tpu.memory_space<vmem>>, vector<32x128xbf16>,
    return
  }
  func.func @transform_0(%arg0: i32) -> (i32, i32) {
    %c0_i32 = arith.constant 0 : i32
    %c0_i32_0 = arith.constant 0 : i32
    return %arg0, %c0_i32 : i32, i32
  }
  func.func @transform_1(%arg0: i32) -> (i32, i32) {
    %c0_i32 = arith.constant 0 : i32
    %c0_i32_0 = arith.constant 0 : i32
    %c0_i32_1 = arith.constant 0 : i32
    return %c0_i32, %c0_i32_0 : i32, i32
  }
  func.func @transform_2(%arg0: i32) -> (i32, i32) {
    %c0_i32 = arith.constant 0 : i32
    %c0_i32_0 = arith.constant 0 : i32
    %c0_i32_1 = arith.constant 0 : i32
    return %c0_i32, %c0_i32_0 : i32, i32
  }
  func.func @transform_3(%arg0: i32) -> (i32, i32) {
    %c0_i32 = arith.constant 0 : i32
    %c0_i32_0 = arith.constant 0 : i32
    return %arg0, %c0_i32 : i32, i32
  }
}

module attributes {stable_mosaic.version = 11 : i64} {
  func.func @_self_pool_kernel(%arg0: i32, %arg1: memref<4x8x128xbf16, #tpu.memory_space<vmem>>, %arg2: memref<4x8x128xbf16, #tpu.memory_space<vmem>>, %arg3: memref<128x128xbf16, #tpu.memory_space<vmem>>, %arg4: memref<1x128xf32, #tpu.memory_space<vmem>>, %arg5: memref<4x128xf32, #tpu.memory_space<vmem>>, %arg6: memref<4x128xbf16, #tpu.memory_space<vmem>>) attributes {dimension_semantics = [#tpu.dimension_semantics<parallel>], iteration_bounds = array<i64: 1>, scalar_prefetch = 0 : i64, scratch_operands = 0 : i64, tpu.core_type = #tpu.core_type<tc>, window_params = [{transform_indices = @transform_0, window_bounds = array<i64: 4, 8, 128>}, {transform_indices = @transform_1, window_bounds = array<i64: 4, 8, 128>}, {pipeline_mode = #tpu.pipeline_mode<synchronous>, transform_indices = @transform_2, window_bounds = array<i64: 128, 128>}, {pipeline_mode = #tpu.pipeline_mode<synchronous>, transform_indices = @transform_3, window_bounds = array<i64: 1, 128>}, {transform_indices = @transform_4, window_bounds = array<i64: 4, 128>}, {transform_indices = @transform_5, window_bounds = array<i64: 4, 128>}]} {
    %c0 = arith.constant 0 : index
    %c0_0 = arith.constant 0 : index
    %c0_1 = arith.constant 0 : index
    %0 = vector.load %arg2[%c0, %c0_0, %c0_1] : memref<4x8x128xbf16, #tpu.memory_space<vmem>>, vector<4x8x128xbf16>
    %1 = arith.extf %0 : vector<4x8x128xbf16> to vector<4x8x128xf32>
    %cst = arith.constant dense<0.000000e+00> : vector<4x128xf32>
    %2 = vector.multi_reduction <add>, %1, %cst [1] : vector<4x8x128xf32> to vector<4x128xf32>
    %cst_2 = arith.constant 8.000000e+00 : f32
    %3 = vector.broadcast %cst_2 : f32 to vector<4x128xf32>
    %4 = arith.divf %2, %3 : vector<4x128xf32>
    %5 = vector.shape_cast %4 : vector<4x128xf32> to vector<4x1x128xf32>
    %cst_3 = arith.constant dense<0.000000e+00> : vector<4x1x8xf32>
    %6 = tpu.matmul %5, %1, %cst_3 {dimension_numbers = #tpu.dot_dimension_numbers<[2], [2], [1], [1], [0, 0, 0, 1, 1, 1], [0], [0]>} : vector<4x1x128xf32>, vector<4x8x128xf32>, vector<4x1x8xf32> -> vector<4x1x8xf32>
    %7 = vector.shape_cast %6 : vector<4x1x8xf32> to vector<4x8xf32>
    %cst_4 = arith.constant dense<0xFF800000> : vector<4xf32>
    %8 = vector.multi_reduction <maximumf>, %7, %cst_4 [1] : vector<4x8xf32> to vector<4xf32>
    %9 = vector.shape_cast %8 : vector<4xf32> to vector<4x1xf32>
    %10 = vector.broadcast %9 : vector<4x1xf32> to vector<4x8xf32>
    %11 = arith.subf %7, %10 : vector<4x8xf32>
    %12 = math.exp %11 : vector<4x8xf32>
    %cst_5 = arith.constant dense<0.000000e+00> : vector<4xf32>
    %13 = vector.multi_reduction <add>, %12, %cst_5 [1] : vector<4x8xf32> to vector<4xf32>
    %14 = vector.shape_cast %13 : vector<4xf32> to vector<4x1xf32>
    %cst_6 = arith.constant 1.000000e+00 : f32
    %15 = vector.broadcast %cst_6 : f32 to vector<4x1xf32>
    %16 = arith.divf %15, %14 : vector<4x1xf32>
    %17 = vector.broadcast %16 : vector<4x1xf32> to vector<4x8xf32>
    %18 = arith.mulf %12, %17 : vector<4x8xf32>
    %19 = vector.shape_cast %18 : vector<4x8xf32> to vector<4x1x8xf32>
    %c0_7 = arith.constant 0 : index
    %c0_8 = arith.constant 0 : index
    %c0_9 = arith.constant 0 : index
    %20 = vector.load %arg1[%c0_7, %c0_8, %c0_9] : memref<4x8x128xbf16, #tpu.memory_space<vmem>>, vector<4x8x128xbf16>
    %21 = arith.extf %20 : vector<4x8x128xbf16> to vector<4x8x128xf32>
    %cst_10 = arith.constant dense<0.000000e+00> : vector<4x1x128xf32>
    %22 = tpu.matmul %19, %21, %cst_10 {dimension_numbers = #tpu.dot_dimension_numbers<[2], [1], [1], [2], [0, 0, 0, 1, 1, 2], [0], [0]>} : vector<4x1x8xf32>, vector<4x8x128xf32>, vector<4x1x128xf32> -> vector<4x1x128xf32>
    %23 = vector.shape_cast %22 : vector<4x1x128xf32> to vector<4x128xf32>
    %c0_11 = arith.constant 0 : index
    %c0_12 = arith.constant 0 : index
    %24 = vector.load %arg5[%c0_11, %c0_12] : memref<4x128xf32, #tpu.memory_space<vmem>>, vector<4x128xf32>
    tpu.vector_store %arg5[%c0_11, %c0_12], %23 {strides = array<i32>} : memref<4x128xf32, #tpu.memory_space<vmem>>, vector<4x128xf32>,
    %c0_13 = arith.constant 0 : index
    %c0_14 = arith.constant 0 : index
    %25 = vector.load %arg3[%c0_13, %c0_14] : memref<128x128xbf16, #tpu.memory_space<vmem>>, vector<128x128xbf16>
    %26 = arith.extf %25 : vector<128x128xbf16> to vector<128x128xf32>
    %cst_15 = arith.constant dense<0.000000e+00> : vector<4x128xf32>
    %27 = tpu.matmul %23, %26, %cst_15 {dimension_numbers = #tpu.dot_dimension_numbers<[1], [0], [0], [1], [0, 0, 1, 1], [], []>} : vector<4x128xf32>, vector<128x128xf32>, vector<4x128xf32> -> vector<4x128xf32>
    %c0_16 = arith.constant 0 : index
    %c0_17 = arith.constant 0 : index
    %28 = vector.load %arg4[%c0_16, %c0_17] : memref<1x128xf32, #tpu.memory_space<vmem>>, vector<1x128xf32>
    %29 = vector.broadcast %28 : vector<1x128xf32> to vector<4x128xf32>
    %30 = arith.addf %27, %29 : vector<4x128xf32>
    %31 = arith.truncf %30 : vector<4x128xf32> to vector<4x128xbf16>
    %c0_18 = arith.constant 0 : index
    %c0_19 = arith.constant 0 : index
    %32 = vector.load %arg6[%c0_18, %c0_19] : memref<4x128xbf16, #tpu.memory_space<vmem>>, vector<4x128xbf16>
    tpu.vector_store %arg6[%c0_18, %c0_19], %31 {strides = array<i32>} : memref<4x128xbf16, #tpu.memory_space<vmem>>, vector<4x128xbf16>,
    return
  }
  func.func @transform_0(%arg0: i32) -> (i32, i32, i32) {
    %c0_i32 = arith.constant 0 : i32
    %c0_i32_0 = arith.constant 0 : i32
    %c0_i32_1 = arith.constant 0 : i32
    return %arg0, %c0_i32, %c0_i32_0 : i32, i32, i32
  }
  func.func @transform_1(%arg0: i32) -> (i32, i32, i32) {
    %c0_i32 = arith.constant 0 : i32
    %c0_i32_0 = arith.constant 0 : i32
    %c0_i32_1 = arith.constant 0 : i32
    return %arg0, %c0_i32, %c0_i32_0 : i32, i32, i32
  }
  func.func @transform_2(%arg0: i32) -> (i32, i32) {
    %c0_i32 = arith.constant 0 : i32
    %c0_i32_0 = arith.constant 0 : i32
    %c0_i32_1 = arith.constant 0 : i32
    return %c0_i32, %c0_i32_0 : i32, i32
  }
  func.func @transform_3(%arg0: i32) -> (i32, i32) {
    %c0_i32 = arith.constant 0 : i32
    %c0_i32_0 = arith.constant 0 : i32
    %c0_i32_1 = arith.constant 0 : i32
    return %c0_i32, %c0_i32_0 : i32, i32
  }
  func.func @transform_4(%arg0: i32) -> (i32, i32) {
    %c0_i32 = arith.constant 0 : i32
    %c0_i32_0 = arith.constant 0 : i32
    return %arg0, %c0_i32 : i32, i32
  }
  func.func @transform_5(%arg0: i32) -> (i32, i32) {
    %c0_i32 = arith.constant 0 : i32
    %c0_i32_0 = arith.constant 0 : i32
    return %arg0, %c0_i32 : i32, i32
  }
}

module attributes {stable_mosaic.version = 11 : i64} {
  func.func @_cross_pool_kernel(%arg0: i32, %arg1: i32, %arg2: memref<2x128xbf16, #tpu.memory_space<vmem>>, %arg3: memref<2x1x8x128xbf16, #tpu.memory_space<vmem>>, %arg4: memref<2x1x8x128xbf16, #tpu.memory_space<vmem>>, %arg5: memref<2x2x128xf32, #tpu.memory_space<vmem>>) attributes {dimension_semantics = [#tpu.dimension_semantics<parallel>, #tpu.dimension_semantics<parallel>], iteration_bounds = array<i64: 1, 1>, scalar_prefetch = 0 : i64, scratch_operands = 0 : i64, tpu.core_type = #tpu.core_type<tc>, window_params = [{transform_indices = @transform_0, window_bounds = array<i64: 2, 128>}, {transform_indices = @transform_1, window_bounds = array<i64: 2, 1, 8, 128>}, {transform_indices = @transform_2, window_bounds = array<i64: 2, 1, 8, 128>}, {transform_indices = @transform_3, window_bounds = array<i64: 2, 2, 128>}]} {
    %c0 = arith.constant 0 : index
    %c0_0 = arith.constant 0 : index
    %0 = vector.load %arg2[%c0, %c0_0] : memref<2x128xbf16, #tpu.memory_space<vmem>>, vector<2x128xbf16>
    %1 = arith.extf %0 : vector<2x128xbf16> to vector<2x128xf32>
    %c0_1 = arith.constant 0 : index
    %c0_2 = arith.constant 0 : index
    %c0_3 = arith.constant 0 : index
    %c0_4 = arith.constant 0 : index
    %2 = vector.load %arg4[%c0_1, %c0_2, %c0_3, %c0_4] : memref<2x1x8x128xbf16, #tpu.memory_space<vmem>>, vector<2x1x8x128xbf16>
    %3 = vector.shape_cast %2 : vector<2x1x8x128xbf16> to vector<2x8x128xbf16>
    %4 = arith.extf %3 : vector<2x8x128xbf16> to vector<2x8x128xf32>
    %5 = vector.shape_cast %4 : vector<2x8x128xf32> to vector<16x128xf32>
    %cst = arith.constant dense<0.000000e+00> : vector<16x2xf32>
    %6 = tpu.matmul %5, %1, %cst {dimension_numbers = #tpu.dot_dimension_numbers<[1], [1], [0], [0], [0, 0, 1, 0], [], []>} : vector<16x128xf32>, vector<2x128xf32>, vector<16x2xf32> -> vector<16x2xf32>
    %7 = vector.shape_cast %6 : vector<16x2xf32> to vector<2x8x2xf32>
    %cst_5 = arith.constant dense<0xFF800000> : vector<2x2xf32>
    %8 = vector.multi_reduction <maximumf>, %7, %cst_5 [1] : vector<2x8x2xf32> to vector<2x2xf32>
    %9 = vector.shape_cast %8 : vector<2x2xf32> to vector<2x1x2xf32>
    %10 = vector.broadcast %9 : vector<2x1x2xf32> to vector<2x8x2xf32>
    %11 = arith.subf %7, %10 : vector<2x8x2xf32>
    %12 = math.exp %11 : vector<2x8x2xf32>
    %cst_6 = arith.constant dense<0.000000e+00> : vector<2x2xf32>
    %13 = vector.multi_reduction <add>, %12, %cst_6 [1] : vector<2x8x2xf32> to vector<2x2xf32>
    %14 = vector.shape_cast %13 : vector<2x2xf32> to vector<2x1x2xf32>
    %cst_7 = arith.constant 1.000000e+00 : f32
    %15 = vector.broadcast %cst_7 : f32 to vector<2x1x2xf32>
    %16 = arith.divf %15, %14 : vector<2x1x2xf32>
    %17 = vector.broadcast %16 : vector<2x1x2xf32> to vector<2x8x2xf32>
    %18 = arith.mulf %12, %17 : vector<2x8x2xf32>
    %c0_8 = arith.constant 0 : index
    %c0_9 = arith.constant 0 : index
    %c0_10 = arith.constant 0 : index
    %c0_11 = arith.constant 0 : index
    %19 = vector.load %arg3[%c0_8, %c0_9, %c0_10, %c0_11] : memref<2x1x8x128xbf16, #tpu.memory_space<vmem>>, vector<2x1x8x128xbf16>
    %20 = vector.shape_cast %19 : vector<2x1x8x128xbf16> to vector<2x8x128xbf16>
    %21 = arith.extf %20 : vector<2x8x128xbf16> to vector<2x8x128xf32>
    %cst_12 = arith.constant dense<0.000000e+00> : vector<2x2x128xf32>
    %22 = tpu.matmul %18, %21, %cst_12 {dimension_numbers = #tpu.dot_dimension_numbers<[1], [1], [2], [2], [0, 0, 0, 2, 1, 2], [0], [0]>} : vector<2x8x2xf32>, vector<2x8x128xf32>, vector<2x2x128xf32> -> vector<2x2x128xf32>
    %23 = tpu.transpose %22, [1, 0, 2] : vector<2x2x128xf32> -> vector<2x2x128xf32>
    %c0_13 = arith.constant 0 : index
    %c0_14 = arith.constant 0 : index
    %c0_15 = arith.constant 0 : index
    %24 = vector.load %arg5[%c0_13, %c0_14, %c0_15] : memref<2x2x128xf32, #tpu.memory_space<vmem>>, vector<2x2x128xf32>
    tpu.vector_store %arg5[%c0_13, %c0_14, %c0_15], %23 {strides = array<i32>} : memref<2x2x128xf32, #tpu.memory_space<vmem>>, vector<2x2x128xf32>,
    return
  }
  func.func @transform_0(%arg0: i32, %arg1: i32) -> (i32, i32) {
    %c0_i32 = arith.constant 0 : i32
    %c0_i32_0 = arith.constant 0 : i32
    return %arg1, %c0_i32 : i32, i32
  }
  func.func @transform_1(%arg0: i32, %arg1: i32) -> (i32, i32, i32, i32) {
    %c1_i32 = arith.constant 1 : i32
    %c0_i32 = arith.constant 0 : i32
    %c0_i32_0 = arith.constant 0 : i32
    %c0_i32_1 = arith.constant 0 : i32
    return %arg0, %c1_i32, %c0_i32, %c0_i32_0 : i32, i32, i32, i32
  }
  func.func @transform_2(%arg0: i32, %arg1: i32) -> (i32, i32, i32, i32) {
    %c1_i32 = arith.constant 1 : i32
    %c0_i32 = arith.constant 0 : i32
    %c0_i32_0 = arith.constant 0 : i32
    %c0_i32_1 = arith.constant 0 : i32
    return %arg0, %c1_i32, %c0_i32, %c0_i32_0 : i32, i32, i32, i32
  }
  func.func @transform_3(%arg0: i32, %arg1: i32) -> (i32, i32, i32) {
    %c0_i32 = arith.constant 0 : i32
    %c0_i32_0 = arith.constant 0 : i32
    return %arg1, %arg0, %c0_i32 : i32, i32, i32
  }
}

module attributes {stable_mosaic.version = 11 : i64} {
  func.func @_cross_pool_kernel(%arg0: i32, %arg1: i32, %arg2: memref<2x128xbf16, #tpu.memory_space<vmem>>, %arg3: memref<2x1x8x128xbf16, #tpu.memory_space<vmem>>, %arg4: memref<2x1x8x128xbf16, #tpu.memory_space<vmem>>, %arg5: memref<2x2x128xf32, #tpu.memory_space<vmem>>) attributes {dimension_semantics = [#tpu.dimension_semantics<parallel>, #tpu.dimension_semantics<parallel>], iteration_bounds = array<i64: 1, 1>, scalar_prefetch = 0 : i64, scratch_operands = 0 : i64, tpu.core_type = #tpu.core_type<tc>, window_params = [{transform_indices = @transform_0, window_bounds = array<i64: 2, 128>}, {transform_indices = @transform_1, window_bounds = array<i64: 2, 1, 8, 128>}, {transform_indices = @transform_2, window_bounds = array<i64: 2, 1, 8, 128>}, {transform_indices = @transform_3, window_bounds = array<i64: 2, 2, 128>}]} {
    %c0 = arith.constant 0 : index
    %c0_0 = arith.constant 0 : index
    %0 = vector.load %arg2[%c0, %c0_0] : memref<2x128xbf16, #tpu.memory_space<vmem>>, vector<2x128xbf16>
    %1 = arith.extf %0 : vector<2x128xbf16> to vector<2x128xf32>
    %c0_1 = arith.constant 0 : index
    %c0_2 = arith.constant 0 : index
    %c0_3 = arith.constant 0 : index
    %c0_4 = arith.constant 0 : index
    %2 = vector.load %arg4[%c0_1, %c0_2, %c0_3, %c0_4] : memref<2x1x8x128xbf16, #tpu.memory_space<vmem>>, vector<2x1x8x128xbf16>
    %3 = vector.shape_cast %2 : vector<2x1x8x128xbf16> to vector<2x8x128xbf16>
    %4 = arith.extf %3 : vector<2x8x128xbf16> to vector<2x8x128xf32>
    %5 = vector.shape_cast %4 : vector<2x8x128xf32> to vector<16x128xf32>
    %cst = arith.constant dense<0.000000e+00> : vector<16x2xf32>
    %6 = tpu.matmul %5, %1, %cst {dimension_numbers = #tpu.dot_dimension_numbers<[1], [1], [0], [0], [0, 0, 1, 0], [], []>} : vector<16x128xf32>, vector<2x128xf32>, vector<16x2xf32> -> vector<16x2xf32>
    %7 = vector.shape_cast %6 : vector<16x2xf32> to vector<2x8x2xf32>
    %cst_5 = arith.constant dense<0xFF800000> : vector<2x2xf32>
    %8 = vector.multi_reduction <maximumf>, %7, %cst_5 [1] : vector<2x8x2xf32> to vector<2x2xf32>
    %9 = vector.shape_cast %8 : vector<2x2xf32> to vector<2x1x2xf32>
    %10 = vector.broadcast %9 : vector<2x1x2xf32> to vector<2x8x2xf32>
    %11 = arith.subf %7, %10 : vector<2x8x2xf32>
    %12 = math.exp %11 : vector<2x8x2xf32>
    %cst_6 = arith.constant dense<0.000000e+00> : vector<2x2xf32>
    %13 = vector.multi_reduction <add>, %12, %cst_6 [1] : vector<2x8x2xf32> to vector<2x2xf32>
    %14 = vector.shape_cast %13 : vector<2x2xf32> to vector<2x1x2xf32>
    %cst_7 = arith.constant 1.000000e+00 : f32
    %15 = vector.broadcast %cst_7 : f32 to vector<2x1x2xf32>
    %16 = arith.divf %15, %14 : vector<2x1x2xf32>
    %17 = vector.broadcast %16 : vector<2x1x2xf32> to vector<2x8x2xf32>
    %18 = arith.mulf %12, %17 : vector<2x8x2xf32>
    %c0_8 = arith.constant 0 : index
    %c0_9 = arith.constant 0 : index
    %c0_10 = arith.constant 0 : index
    %c0_11 = arith.constant 0 : index
    %19 = vector.load %arg3[%c0_8, %c0_9, %c0_10, %c0_11] : memref<2x1x8x128xbf16, #tpu.memory_space<vmem>>, vector<2x1x8x128xbf16>
    %20 = vector.shape_cast %19 : vector<2x1x8x128xbf16> to vector<2x8x128xbf16>
    %21 = arith.extf %20 : vector<2x8x128xbf16> to vector<2x8x128xf32>
    %cst_12 = arith.constant dense<0.000000e+00> : vector<2x2x128xf32>
    %22 = tpu.matmul %18, %21, %cst_12 {dimension_numbers = #tpu.dot_dimension_numbers<[1], [1], [2], [2], [0, 0, 0, 2, 1, 2], [0], [0]>} : vector<2x8x2xf32>, vector<2x8x128xf32>, vector<2x2x128xf32> -> vector<2x2x128xf32>
    %c0_13 = arith.constant 0 : index
    %c0_14 = arith.constant 0 : index
    %c0_15 = arith.constant 0 : index
    %23 = vector.load %arg5[%c0_13, %c0_14, %c0_15] : memref<2x2x128xf32, #tpu.memory_space<vmem>>, vector<2x2x128xf32>
    tpu.vector_store %arg5[%c0_13, %c0_14, %c0_15], %22 {strides = array<i32>} : memref<2x2x128xf32, #tpu.memory_space<vmem>>, vector<2x2x128xf32>,
    return
  }
  func.func @transform_0(%arg0: i32, %arg1: i32) -> (i32, i32) {
    %c0_i32 = arith.constant 0 : i32
    %c0_i32_0 = arith.constant 0 : i32
    return %arg1, %c0_i32 : i32, i32
  }
  func.func @transform_1(%arg0: i32, %arg1: i32) -> (i32, i32, i32, i32) {
    %c0_i32 = arith.constant 0 : i32
    %c0_i32_0 = arith.constant 0 : i32
    %c0_i32_1 = arith.constant 0 : i32
    %c0_i32_2 = arith.constant 0 : i32
    return %arg0, %c0_i32, %c0_i32_0, %c0_i32_1 : i32, i32, i32, i32
  }
  func.func @transform_2(%arg0: i32, %arg1: i32) -> (i32, i32, i32, i32) {
    %c0_i32 = arith.constant 0 : i32
    %c0_i32_0 = arith.constant 0 : i32
    %c0_i32_1 = arith.constant 0 : i32
    %c0_i32_2 = arith.constant 0 : i32
    return %arg0, %c0_i32, %c0_i32_0, %c0_i32_1 : i32, i32, i32, i32
  }
  func.func @transform_3(%arg0: i32, %arg1: i32) -> (i32, i32, i32) {
    %c0_i32 = arith.constant 0 : i32
    %c0_i32_0 = arith.constant 0 : i32
    return %arg0, %arg1, %c0_i32 : i32, i32, i32
  }
}

</mosaic_0001>

<llo_original>
// kernel: attmodule_dir_forward.4
$region0: #{attmodule_dir_forward.4}
  #allocation0 [shape = 'u32[]', space=smem, size = 0x4, offset = 0x4, fixed_abs, tag = 'smem constant byte address 0x4 - core index']
  #allocation1 [shape = 'u32[144,128]{1,0:T(1,128)}', space=vmem, size = 0x12000, scoped, tag = 'internal scratch']
  %s0 = inlined_call_operand.hbm [shape: f32[32,128], index: 0, kind: input, shape index: {}]
  %s1 = inlined_call_operand.hbm [shape: bf16[128,128], index: 1, kind: input, shape index: {}]
  %s2 = inlined_call_operand.hbm [shape: f32[1,128], index: 2, kind: input, shape index: {}]
  %s3 = inlined_call_operand.hbm [shape: bf16[32,128], index: 3, kind: output, shape index: {}]
  %s4 = sld [smem:[#allocation0]]
  $region34: #{attmodule_dir_forward.4} parent=0
    _
  %s6 = ssub.s32 1, %s4
  %s7 = scalar_select 0, %s6, %s4
  $region1: #{attmodule_dir_forward.4} parent=0
    #allocation2 [shape = 'u8[16384]{0}', space=vmem, size = 0x4000, scoped, tag = 'input window, operand 0, single buffered']
    #allocation3 [shape = 's32[1]{0}', space=sflag, size = 0x4, scoped, tag = 'scoped memory for attmodule_dir_forward.4']
    #allocation4 [shape = 's32[1]{0}', space=sflag, size = 0x4, scoped, tag = 'scoped memory for attmodule_dir_forward.4']
    #allocation5 [shape = 'u8[32768]{0}', space=vmem, size = 0x8000, scoped, tag = 'input window, operand 1, single buffered']
    #allocation6 [shape = 's32[1]{0}', space=sflag, size = 0x4, scoped, tag = 'scoped memory for attmodule_dir_forward.4']
    #allocation7 [shape = 'u8[512]{0}', space=vmem, size = 0x400, scoped, tag = 'input window, operand 2, single buffered']
    #allocation8 [shape = 'u8[8192]{0}', space=vmem, size = 0x2000, scoped, tag = 'output window, operand 0, single buffered']
    %8 = vsyncpa [#allocation3], 0
    %9 = vsyncpa [#allocation6], 0
    %10 = vsyncpa [#allocation4], 0
    // Predicated region
    $region2: #{attmodule_dir_forward.4} parent=1 // pred_check
      _
    $region3: #{attmodule_dir_forward.4} parent=1 // pred_check_branch
      %12 = sbr.rel (0) target = $region5
    $region4: #{attmodule_dir_forward.4} parent=1 // pred_region
      %s14 = ssub.s32 512, 512
      %15 = vsyncadd [#allocation3], %s14
      %s16 = sshll.u32 [#allocation2], 4
      %s17 = int_to_ptr.vmem [resolvable:$true] %s16
      %22 = dma.hbm_to_vmem [thread:$0]  %s0, 512, %s17, [#allocation3], 128, 128, 8
    $region5: #{attmodule_dir_forward.4} parent=1 // pred_fallthru
      _
    // Predicated region
    $region6: #{attmodule_dir_forward.4} parent=1 // pred_check
      _
    $region7: #{attmodule_dir_forward.4} parent=1 // pred_check_branch
      %24 = sbr.rel (0) target = $region9
    $region8: #{attmodule_dir_forward.4} parent=1 // pred_region
      %s26 = ssub.s32 1024, 1024
      %27 = vsyncadd [#allocation6], %s26
      %s28 = sshll.u32 [#allocation5], 4
      %s29 = int_to_ptr.vmem [resolvable:$true] %s28
      %34 = dma.hbm_to_vmem [thread:$0]  %s1, 1024, %s29, [#allocation6], 64, 64, 4
    $region9: #{attmodule_dir_forward.4} parent=1 // pred_fallthru
      _
    // Predicated region
    $region10: #{attmodule_dir_forward.4} parent=1 // pred_check
      _
    $region11: #{attmodule_dir_forward.4} parent=1 // pred_check_branch
      %36 = sbr.rel (0) target = $region13
    $region12: #{attmodule_dir_forward.4} parent=1 // pred_region
      %s38 = ssub.s32 16, 16
      %39 = vsyncadd [#allocation6], %s38
      %s41 = sshll.u32 [#allocation7], 4
      %s42 = int_to_ptr.vmem [resolvable:$true] %s41
      %44 = dma.hbm_to_vmem [thread:$0]  %s2, 16, %s42, [#allocation6]
    $region13: #{attmodule_dir_forward.4} parent=1 // pred_fallthru
      _
    // Predicated region
    $region14: #{attmodule_dir_forward.4} parent=1 // pred_check
      _
    $region15: #{attmodule_dir_forward.4} parent=1 // pred_check_branch
      %46 = sbr.rel (0) target = $region17
    $region16: #{attmodule_dir_forward.4} parent=1 // pred_region
      %47 = dma.done [#allocation3], 512
    $region17: #{attmodule_dir_forward.4} parent=1 // pred_fallthru
      _
    // Predicated region
    $region18: #{attmodule_dir_forward.4} parent=1 // pred_check
      _
    $region19: #{attmodule_dir_forward.4} parent=1 // pred_check_branch
      %49 = sbr.rel (0) target = $region21
    $region20: #{attmodule_dir_forward.4} parent=1 // pred_region
      %50 = dma.done [#allocation6], 1024
    $region21: #{attmodule_dir_forward.4} parent=1 // pred_fallthru
      _
    // Predicated region
    $region22: #{attmodule_dir_forward.4} parent=1 // pred_check
      _
    $region23: #{attmodule_dir_forward.4} parent=1 // pred_check_branch
      %52 = sbr.rel (0) target = $region25
    $region24: #{attmodule_dir_forward.4} parent=1 // pred_region
      %53 = dma.done [#allocation6], 16
    $region25: #{attmodule_dir_forward.4} parent=1 // pred_fallthru
      _
    %v54 = vld [vmem:[#allocation2] sm:$0xff]
    %v55 = vld [vmem:[#allocation2 + $0x8] sm:$0xff]
    %v56 = vld [vmem:[#allocation2 + $0x10] sm:$0xff]
    %v57 = vld [vmem:[#allocation2 + $0x18] sm:$0xff]
    %v58 = vld [vmem:[#allocation5] sm:$0xf]
    %v59 = vld [vmem:[#allocation5 + $0x4] sm:$0xf]
    %v60 = vld [vmem:[#allocation5 + $0x8] sm:$0xf]
    %v61 = vld [vmem:[#allocation5 + $0xc] sm:$0xf]
    %v62 = vld [vmem:[#allocation5 + $0x10] sm:$0xf]
    %v63 = vld [vmem:[#allocation5 + $0x14] sm:$0xf]
    %v64 = vld [vmem:[#allocation5 + $0x18] sm:$0xf]
    %v65 = vld [vmem:[#allocation5 + $0x1c] sm:$0xf]
    %v66 = vld [vmem:[#allocation5 + $0x20] sm:$0xf]
    %v67 = vld [vmem:[#allocation5 + $0x24] sm:$0xf]
    %v68 = vld [vmem:[#allocation5 + $0x28] sm:$0xf]
    %v69 = vld [vmem:[#allocation5 + $0x2c] sm:$0xf]
    %v70 = vld [vmem:[#allocation5 + $0x30] sm:$0xf]
    %v71 = vld [vmem:[#allocation5 + $0x34] sm:$0xf]
    %v72 = vld [vmem:[#allocation5 + $0x38] sm:$0xf]
    %v73 = vld [vmem:[#allocation5 + $0x3c] sm:$0xf]
    %v74 = vunpack.c.l.bf16 %v58
    %v75 = vunpack.c.l.bf16 %v59
    %v76 = vunpack.c.l.bf16 %v60
    %v77 = vunpack.c.l.bf16 %v61
    %v78 = vunpack.c.l.bf16 %v62
    %v79 = vunpack.c.l.bf16 %v63
    %v80 = vunpack.c.l.bf16 %v64
    %v81 = vunpack.c.l.bf16 %v65
    %v82 = vunpack.c.l.bf16 %v66
    %v83 = vunpack.c.l.bf16 %v67
    %v84 = vunpack.c.l.bf16 %v68
    %v85 = vunpack.c.l.bf16 %v69
    %v86 = vunpack.c.l.bf16 %v70
    %v87 = vunpack.c.l.bf16 %v71
    %v88 = vunpack.c.l.bf16 %v72
    %v89 = vunpack.c.l.bf16 %v73
    %v90 = vld [vmem:[#allocation7] sm:$0x1]
    %v92 = vlaneseq
    %v93 = vshrl.u32 %v92, 7
    %v94 = vsub.s32 0, %v93
    %v95 = vrot.slane %v90, %v94
    %97 = vmatprep.subr.mxu0 0.0
    %98 = vmatpush1.msra.mxu0 %v74
    %99 = vmatprep.subr.mxu0 0.0
    %100 = vmatpush1.msra.mxu0 %v75
    %101 = vmatprep.subr.mxu0 0.0
    %102 = vmatpush1.msra.mxu0 %v76
    %103 = vmatprep.subr.mxu0 0.0
    %104 = vmatpush1.msra.mxu0 %v77
    %105 = vmatprep.subr.mxu0 0.0
    %106 = vmatpush1.msra.mxu0 %v78
    %107 = vmatprep.subr.mxu0 0.0
    %108 = vmatpush1.msra.mxu0 %v79
    %109 = vmatprep.subr.mxu0 0.0
    %110 = vmatpush1.msra.mxu0 %v80
    %111 = vmatprep.subr.mxu0 0.0
    %112 = vmatpush1.msra.mxu0 %v81
    %113 = vmatprep.subr.mxu0 0.0
    %114 = vmatpush1.msra.mxu0 %v82
    %115 = vmatprep.subr.mxu0 0.0
    %116 = vmatpush1.msra.mxu0 %v83
    %117 = vmatprep.subr.mxu0 0.0
    %118 = vmatpush1.msra.mxu0 %v84
    %119 = vmatprep.subr.mxu0 0.0
    %120 = vmatpush1.msra.mxu0 %v85
    %121 = vmatprep.subr.mxu0 0.0
    %122 = vmatpush1.msra.mxu0 %v86
    %123 = vmatprep.subr.mxu0 0.0
    %124 = vmatpush1.msra.mxu0 %v87
    %125 = vmatprep.subr.mxu0 0.0
    %126 = vmatpush1.msra.mxu0 %v88
    %127 = vmatprep.subr.mxu0 0.0
    %128 = vmatpush1.msra.mxu0 %v89
    %129 = vmatprep.subr.mxu0 0.0
    %130 = vmatpush1.msra.mxu0 0.0
    %131 = vmatprep.subr.mxu0 0.0
    %132 = vmatpush1.msra.mxu0 0.0
    %133 = vmatprep.subr.mxu0 0.0
    %134 = vmatpush1.msra.mxu0 0.0
    %135 = vmatprep.subr.mxu0 0.0
    %136 = vmatpush1.msra.mxu0 0.0
    %137 = vmatprep.subr.mxu0 0.0
    %138 = vmatpush1.msra.mxu0 0.0
    %139 = vmatprep.subr.mxu0 0.0
    %140 = vmatpush1.msra.mxu0 0.0
    %141 = vmatprep.subr.mxu0 0.0
    %142 = vmatpush1.msra.mxu0 0.0
    %143 = vmatprep.subr.mxu0 0.0
    %144 = vmatpush1.msra.mxu0 0.0
    %145 = vmatprep.subr.mxu0 0.0
    %146 = vmatpush1.msra.mxu0 0.0
    %147 = vmatprep.subr.mxu0 0.0
    %148 = vmatpush1.msra.mxu0 0.0
    %149 = vmatprep.subr.mxu0 0.0
    %150 = vmatpush1.msra.mxu0 0.0
    %151 = vmatprep.subr.mxu0 0.0
    %152 = vmatpush1.msra.mxu0 0.0
    %153 = vmatprep.subr.mxu0 0.0
    %154 = vmatpush1.msra.mxu0 0.0
    %155 = vmatprep.subr.mxu0 0.0
    %156 = vmatpush1.msra.mxu0 0.0
    %157 = vmatprep.subr.mxu0 0.0
    %158 = vmatpush1.msra.mxu0 0.0
    %159 = vmatprep.subr.mxu0 0.0
    %160 = vmatpush1.msra.mxu0 0.0
    %161 = vmatprep.mubr.f32.mxu0 0.0
    %162 = vmatmul.mubr.f32.gmra.mrb[0].mxu0 %v54
    %v163 = vpop.f32.mrb[0].mxu0
    %v164 = vadd.f32 %v95, %v163
    %v165 = vpop.f32.mrb[0].mxu0
    %166 = vmatprep.mubr.f32.mxu0 0.0
    %167 = vmatmul.mubr.f32.gmra.mrb[0].mxu0 %v55
    %v168 = vpop.f32.mrb[0].mxu0
    %v169 = vadd.f32 %v95, %v168
    %v170 = vpop.f32.mrb[0].mxu0
    %171 = vmatprep.mubr.f32.mxu0 0.0
    %172 = vmatmul.mubr.f32.gmra.mrb[0].mxu0 %v56
    %v173 = vpop.f32.mrb[0].mxu0
    %v174 = vadd.f32 %v95, %v173
    %v175 = vpop.f32.mrb[0].mxu0
    %176 = vmatprep.mubr.f32.mxu0 0.0
    %177 = vmatmul.mubr.f32.gmra.mrb[0].mxu0 %v57
    %v178 = vpop.f32.mrb[0].mxu0
    %v179 = vadd.f32 %v95, %v178
    %v180 = vpop.f32.mrb[0].mxu0
    %181 = vdwg.mxu0
    %v182 = vpack.c.bf16 %v169, %v164
    %v183 = vpack.c.bf16 %v179, %v174
    %v186 = vunpack.c.l.b16 %v182
    %v187 = vunpack.c.h.b16 %v182
    %v188 = vunpack.c.l.b16 %v183
    %v189 = vunpack.c.h.b16 %v183
    %v190 = vpack.c.b16 %v186, %v186
    %v191 = vpack.c.b16 %v187, %v187
    %v192 = vpack.c.b16 %v188, %v188
    %v193 = vpack.c.b16 %v189, %v189
    %198 = vst [vmem:[#allocation8] sm:$0xf] %v190
    %199 = vst [vmem:[#allocation8 + $0x4] sm:$0xf] %v191
    %200 = vst [vmem:[#allocation8 + $0x8] sm:$0xf] %v192
    %201 = vst [vmem:[#allocation8 + $0xc] sm:$0xf] %v193
    // Predicated region
    $region26: #{attmodule_dir_forward.4} parent=1 // pred_check
      _
    $region27: #{attmodule_dir_forward.4} parent=1 // pred_check_branch
      %203 = sbr.rel (0) target = $region29
    $region28: #{attmodule_dir_forward.4} parent=1 // pred_region
      %s205 = ssub.s32 256, 256
      %206 = vsyncadd [#allocation4], %s205
      %s207 = sshll.u32 [#allocation8], 4
      %s208 = int_to_ptr.vmem [resolvable:$true] %s207
      %213 = dma.vmem_to_hbm [thread:$0]  %s208, 256, %s3, [#allocation4], 64, 64, 4
    $region29: #{attmodule_dir_forward.4} parent=1 // pred_fallthru
      _
    // Predicated region
    $region30: #{attmodule_dir_forward.4} parent=1 // pred_check
      _
    $region31: #{attmodule_dir_forward.4} parent=1 // pred_check_branch
      %215 = sbr.rel (0) target = $region33
    $region32: #{attmodule_dir_forward.4} parent=1 // pred_region
      %216 = dma.done [#allocation4], 256
    $region33: #{attmodule_dir_forward.4} parent=1 // pred_fallthru
      _
    %217 = vsyncpa [#allocation3], 1
    %218 = vsyncpa [#allocation6], 1
    %219 = vsyncpa [#allocation4], 1

// kernel: attmodule_dir_forward.6
$region0: #{attmodule_dir_forward.6}
  #allocation0 [shape = 'u32[]', space=smem, size = 0x4, offset = 0x4, fixed_abs, tag = 'smem constant byte address 0x4 - core index']
  #allocation1 [shape = 'u32[144,128]{1,0:T(1,128)}', space=vmem, size = 0x12000, scoped, tag = 'internal scratch']
  %s0 = inlined_call_operand.hbm [shape: bf16[2,128], index: 0, kind: input, shape index: {}]
  %s1 = inlined_call_operand.hbm [shape: bf16[2,2,8,128], index: 1, kind: input, shape index: {}]
  %s2 = inlined_call_operand.hbm [shape: bf16[2,2,8,128], index: 2, kind: input, shape index: {}]
  %s3 = inlined_call_operand.hbm [shape: f32[2,2,128], index: 3, kind: output, shape index: {}]
  %s4 = sld [smem:[#allocation0]]
  $region34: #{attmodule_dir_forward.6} parent=0
    _
  %s6 = ssub.s32 1, %s4
  %s7 = scalar_select 0, %s6, %s4
  $region1: #{attmodule_dir_forward.6} parent=0
    #allocation2 [shape = 'u8[512]{0}', space=vmem, size = 0x400, scoped, tag = 'input window, operand 0, single buffered']
    #allocation3 [shape = 's32[1]{0}', space=sflag, size = 0x4, scoped, tag = 'scoped memory for attmodule_dir_forward.6']
    #allocation4 [shape = 's32[1]{0}', space=sflag, size = 0x4, scoped, tag = 'scoped memory for attmodule_dir_forward.6']
    #allocation5 [shape = 'u8[4096]{0}', space=vmem, size = 0x1000, scoped, tag = 'input window, operand 1, single buffered']
    #allocation6 [shape = 's32[1]{0}', space=sflag, size = 0x4, scoped, tag = 'scoped memory for attmodule_dir_forward.6']
    #allocation7 [shape = 'u8[4096]{0}', space=vmem, size = 0x1000, scoped, tag = 'input window, operand 2, single buffered']
    #allocation8 [shape = 'u8[2048]{0}', space=vmem, size = 0x800, scoped, tag = 'output window, operand 0, single buffered']
    %8 = vsyncpa [#allocation3], 0
    %9 = vsyncpa [#allocation6], 0
    %10 = vsyncpa [#allocation4], 0
    // Predicated region
    $region2: #{attmodule_dir_forward.6} parent=1 // pred_check
      _
    $region3: #{attmodule_dir_forward.6} parent=1 // pred_check_branch
      %12 = sbr.rel (0) target = $region5
    $region4: #{attmodule_dir_forward.6} parent=1 // pred_region
      %s14 = ssub.s32 16, 16
      %15 = vsyncadd [#allocation3], %s14
      %s17 = sshll.u32 [#allocation2], 4
      %s18 = int_to_ptr.vmem [resolvable:$true] %s17
      %20 = dma.hbm_to_vmem [thread:$0]  %s0, 16, %s18, [#allocation3]
    $region5: #{attmodule_dir_forward.6} parent=1 // pred_fallthru
      _
    // Predicated region
    $region6: #{attmodule_dir_forward.6} parent=1 // pred_check
      _
    $region7: #{attmodule_dir_forward.6} parent=1 // pred_check_branch
      %22 = sbr.rel (0) target = $region9
    $region8: #{attmodule_dir_forward.6} parent=1 // pred_region
      %s24 = ssub.s32 128, 128
      %25 = vsyncadd [#allocation6], %s24
      %s26 = scalar_lea.hbm %s1, 64
      %s27 = sshll.u32 [#allocation5], 4
      %s28 = int_to_ptr.vmem [resolvable:$true] %s27
      %33 = dma.hbm_to_vmem [thread:$0]  %s26, 128, %s28, [#allocation6], 128, 64, 4
    $region9: #{attmodule_dir_forward.6} parent=1 // pred_fallthru
      _
    // Predicated region
    $region10: #{attmodule_dir_forward.6} parent=1 // pred_check
      _
    $region11: #{attmodule_dir_forward.6} parent=1 // pred_check_branch
      %35 = sbr.rel (0) target = $region13
    $region12: #{attmodule_dir_forward.6} parent=1 // pred_region
      %s37 = ssub.s32 128, 128
      %38 = vsyncadd [#allocation6], %s37
      %s39 = scalar_lea.hbm %s2, 64
      %s40 = sshll.u32 [#allocation7], 4
      %s41 = int_to_ptr.vmem [resolvable:$true] %s40
      %46 = dma.hbm_to_vmem [thread:$0]  %s39, 128, %s41, [#allocation6], 128, 64, 4
    $region13: #{attmodule_dir_forward.6} parent=1 // pred_fallthru
      _
    // Predicated region
    $region14: #{attmodule_dir_forward.6} parent=1 // pred_check
      _
    $region15: #{attmodule_dir_forward.6} parent=1 // pred_check_branch
      %48 = sbr.rel (0) target = $region17
    $region16: #{attmodule_dir_forward.6} parent=1 // pred_region
      %49 = dma.done [#allocation3], 16
    $region17: #{attmodule_dir_forward.6} parent=1 // pred_fallthru
      _
    // Predicated region
    $region18: #{attmodule_dir_forward.6} parent=1 // pred_check
      _
    $region19: #{attmodule_dir_forward.6} parent=1 // pred_check_branch
      %51 = sbr.rel (0) target = $region21
    $region20: #{attmodule_dir_forward.6} parent=1 // pred_region
      %52 = dma.done [#allocation6], 128
    $region21: #{attmodule_dir_forward.6} parent=1 // pred_fallthru
      _
    // Predicated region
    $region22: #{attmodule_dir_forward.6} parent=1 // pred_check
      _
    $region23: #{attmodule_dir_forward.6} parent=1 // pred_check_branch
      %54 = sbr.rel (0) target = $region25
    $region24: #{attmodule_dir_forward.6} parent=1 // pred_region
      %55 = dma.done [#allocation6], 128
    $region25: #{attmodule_dir_forward.6} parent=1 // pred_fallthru
      _
    %v56 = vld [vmem:[#allocation2] sm:$0x1]
    %v57 = vunpack.c.l.bf16 %v56
    %v58 = vld [vmem:[#allocation7] sm:$0xf]
    %v59 = vld [vmem:[#allocation7 + $0x4] sm:$0xf]
    %v60 = vunpack.c.l.bf16 %v58
    %v61 = vunpack.c.l.bf16 %v59
    %62 = vmatprep.subr.mxu0 0.0
    %63 = vmatpush1.xpose.msra.mxu0 %v57
    %64 = vmatprep.subr.mxu0 0.0
    %65 = vmatpush1.xpose.msra.mxu0 0.0
    %66 = vmatprep.subr.mxu0 0.0
    %67 = vmatpush1.xpose.msra.mxu0 0.0
    %68 = vmatprep.subr.mxu0 0.0
    %69 = vmatpush1.xpose.msra.mxu0 0.0
    %70 = vmatprep.subr.mxu0 0.0
    %71 = vmatpush1.xpose.msra.mxu0 0.0
    %72 = vmatprep.subr.mxu0 0.0
    %73 = vmatpush1.xpose.msra.mxu0 0.0
    %74 = vmatprep.subr.mxu0 0.0
    %75 = vmatpush1.xpose.msra.mxu0 0.0
    %76 = vmatprep.subr.mxu0 0.0
    %77 = vmatpush1.xpose.msra.mxu0 0.0
    %78 = vmatprep.subr.mxu0 0.0
    %79 = vmatpush1.xpose.msra.mxu0 0.0
    %80 = vmatprep.subr.mxu0 0.0
    %81 = vmatpush1.xpose.msra.mxu0 0.0
    %82 = vmatprep.subr.mxu0 0.0
    %83 = vmatpush1.xpose.msra.mxu0 0.0
    %84 = vmatprep.subr.mxu0 0.0
    %85 = vmatpush1.xpose.msra.mxu0 0.0
    %86 = vmatprep.subr.mxu0 0.0
    %87 = vmatpush1.xpose.msra.mxu0 0.0
    %88 = vmatprep.subr.mxu0 0.0
    %89 = vmatpush1.xpose.msra.mxu0 0.0
    %90 = vmatprep.subr.mxu0 0.0
    %91 = vmatpush1.xpose.msra.mxu0 0.0
    %92 = vmatprep.subr.mxu0 0.0
    %93 = vmatpush1.xpose.msra.mxu0 0.0
    %94 = vmatprep.subr.mxu0 0.0
    %95 = vmatpush1.xpose.msra.mxu0 0.0
    %96 = vmatprep.subr.mxu0 0.0
    %97 = vmatpush1.xpose.msra.mxu0 0.0
    %98 = vmatprep.subr.mxu0 0.0
    %99 = vmatpush1.xpose.msra.mxu0 0.0
    %100 = vmatprep.subr.mxu0 0.0
    %101 = vmatpush1.xpose.msra.mxu0 0.0
    %102 = vmatprep.subr.mxu0 0.0
    %103 = vmatpush1.xpose.msra.mxu0 0.0
    %104 = vmatprep.subr.mxu0 0.0
    %105 = vmatpush1.xpose.msra.mxu0 0.0
    %106 = vmatprep.subr.mxu0 0.0
    %107 = vmatpush1.xpose.msra.mxu0 0.0
    %108 = vmatprep.subr.mxu0 0.0
    %109 = vmatpush1.xpose.msra.mxu0 0.0
    %110 = vmatprep.subr.mxu0 0.0
    %111 = vmatpush1.xpose.msra.mxu0 0.0
    %112 = vmatprep.subr.mxu0 0.0
    %113 = vmatpush1.xpose.msra.mxu0 0.0
    %114 = vmatprep.subr.mxu0 0.0
    %115 = vmatpush1.xpose.msra.mxu0 0.0
    %116 = vmatprep.subr.mxu0 0.0
    %117 = vmatpush1.xpose.msra.mxu0 0.0
    %118 = vmatprep.subr.mxu0 0.0
    %119 = vmatpush1.xpose.msra.mxu0 0.0
    %120 = vmatprep.subr.mxu0 0.0
    %121 = vmatpush1.xpose.msra.mxu0 0.0
    %122 = vmatprep.subr.mxu0 0.0
    %123 = vmatpush1.xpose.msra.mxu0 0.0
    %124 = vmatprep.subr.mxu0 0.0
    %125 = vmatpush1.xpose.msra.mxu0 0.0
    %126 = vmatprep.mubr.f32.mxu0 0.0
    %127 = vmatmul.mubr.f32.gmra.mrb[0].mxu0 %v60
    %v128 = vpop.f32.mrb[0].mxu0
    %v129 = vadd.f32 0.0, %v128
    %v130 = vpop.f32.mrb[0].mxu0
    %131 = vmatprep.mubr.f32.mxu0 0.0
    %132 = vmatmul.mubr.f32.gmra.mrb[0].mxu0 %v61
    %v133 = vpop.f32.mrb[0].mxu0
    %v134 = vadd.f32 0.0, %v133
    %v135 = vpop.f32.mrb[0].mxu0
    %136 = vdwg.mxu0
    %vm137 = vcmask 15360
    %v138 = vsel %vm137, %v129, -inf
    %v139 = vrot.slane %v138, 4
    %v140 = vmax.f32 %v138, %v139
    %v141 = vrot.slane %v140, 2
    %v142 = vmax.f32 %v140, %v141
    %v143 = vrot.slane %v142, 1
    %v144 = vmax.f32 %v142, %v143
    %v145 = vsel %vm137, %v134, -inf
    %v146 = vrot.slane %v145, 4
    %v147 = vmax.f32 %v145, %v146
    %v148 = vrot.slane %v147, 2
    %v149 = vmax.f32 %v147, %v148
    %v150 = vrot.slane %v149, 1
    %v151 = vmax.f32 %v149, %v150
    %v152 = vsub.f32 %v129, %v144
    %v153 = vsub.f32 %v134, %v151
    %v154 = vmul.f32 %v152, 1.442695
    %v155 = vpow.pop %v154
    %v156 = vmul.f32 %v153, 1.442695
    %v157 = vpow.pop %v156
    %v158 = vsel %vm137, %v155, 0.0
    %v159 = vrot.slane %v158, 4
    %v160 = vadd.f32 %v158, %v159
    %v161 = vrot.slane %v160, 2
    %v162 = vadd.f32 %v160, %v161
    %v163 = vrot.slane %v162, 1
    %v164 = vadd.f32 %v162, %v163
    %v165 = vsel %vm137, %v157, 0.0
    %v166 = vrot.slane %v165, 4
    %v167 = vadd.f32 %v165, %v166
    %v168 = vrot.slane %v167, 2
    %v169 = vadd.f32 %v167, %v168
    %v170 = vrot.slane %v169, 1
    %v171 = vadd.f32 %v169, %v170
    %v172 = vrcp.pop %v164
    %v173 = vmul.f32 1.0, %v172
    %v174 = vrcp.pop %v171
    %v175 = vmul.f32 1.0, %v174
    %v176 = vmul.f32 %v155, %v173
    %v177 = vmul.f32 %v157, %v175
    %v178 = vld [vmem:[#allocation5] sm:$0xf]
    %v179 = vld [vmem:[#allocation5 + $0x4] sm:$0xf]
    %v180 = vunpack.c.l.bf16 %v178
    %v181 = vunpack.c.l.bf16 %v179
    %182 = vxpose.xlu0.b32.start [1/16] %v176, 128
    %183 = vxpose.xlu0.b32.cont [2/16] 0.0, 128
    %184 = vxpose.xlu0.b32.cont [3/16] 0.0, 128
    %185 = vxpose.xlu0.b32.cont [4/16] 0.0, 128
    %186 = vxpose.xlu0.b32.cont [5/16] 0.0, 128
    %187 = vxpose.xlu0.b32.cont [6/16] 0.0, 128
    %188 = vxpose.xlu0.b32.cont [7/16] 0.0, 128
    %189 = vxpose.xlu0.b32.cont [8/16] 0.0, 128
    %190 = vxpose.xlu0.b32.cont [9/16] 0.0, 128
    %191 = vxpose.xlu0.b32.cont [10/16] 0.0, 128
    %192 = vxpose.xlu0.b32.cont [11/16] 0.0, 128
    %193 = vxpose.xlu0.b32.cont [12/16] 0.0, 128
    %194 = vxpose.xlu0.b32.cont [13/16] 0.0, 128
    %195 = vxpose.xlu0.b32.cont [14/16] 0.0, 128
    %196 = vxpose.xlu0.b32.cont [15/16] 0.0, 128
    %197 = vxpose.xlu0.b32.end [16/16] 0.0, 128
    %v198 = vpop.trf.xlu0
    %v199 = vpop.trf.xlu0
    %v200 = vpop.trf.xlu0
    %v201 = vpop.trf.xlu0
    %v202 = vpop.trf.xlu0
    %v203 = vpop.trf.xlu0
    %v204 = vpop.trf.xlu0
    %v205 = vpop.trf.xlu0
    %v206 = vpop.trf.xlu0
    %v207 = vpop.trf.xlu0
    %v208 = vpop.trf.xlu0
    %v209 = vpop.trf.xlu0
    %v210 = vpop.trf.xlu0
    %v211 = vpop.trf.xlu0
    %v212 = vpop.trf.xlu0
    %v213 = vpop.trf.xlu0
    %vm214 = vcmask 64512
    %v216 = vsel %vm214, %v198, 0
    %218 = vmatprep.subr.mxu0 0.0
    %219 = vmatpush1.msra.mxu0 %v180
    %220 = vmatprep.subr.mxu0 0.0
    %221 = vmatpush1.msra.mxu0 0.0
    %222 = vmatprep.subr.mxu0 0.0
    %223 = vmatpush1.msra.mxu0 0.0
    %224 = vmatprep.subr.mxu0 0.0
    %225 = vmatpush1.msra.mxu0 0.0
    %226 = vmatprep.subr.mxu0 0.0
    %227 = vmatpush1.msra.mxu0 0.0
    %228 = vmatprep.subr.mxu0 0.0
    %229 = vmatpush1.msra.mxu0 0.0
    %230 = vmatprep.subr.mxu0 0.0
    %231 = vmatpush1.msra.mxu0 0.0
    %232 = vmatprep.subr.mxu0 0.0
    %233 = vmatpush1.msra.mxu0 0.0
    %234 = vmatprep.subr.mxu0 0.0
    %235 = vmatpush1.msra.mxu0 0.0
    %236 = vmatprep.subr.mxu0 0.0
    %237 = vmatpush1.msra.mxu0 0.0
    %238 = vmatprep.subr.mxu0 0.0
    %239 = vmatpush1.msra.mxu0 0.0
    %240 = vmatprep.subr.mxu0 0.0
    %241 = vmatpush1.msra.mxu0 0.0
    %242 = vmatprep.subr.mxu0 0.0
    %243 = vmatpush1.msra.mxu0 0.0
    %244 = vmatprep.subr.mxu0 0.0
    %245 = vmatpush1.msra.mxu0 0.0
    %246 = vmatprep.subr.mxu0 0.0
    %247 = vmatpush1.msra.mxu0 0.0
    %248 = vmatprep.subr.mxu0 0.0
    %249 = vmatpush1.msra.mxu0 0.0
    %250 = vmatprep.subr.mxu0 0.0
    %251 = vmatpush1.msra.mxu0 0.0
    %252 = vmatprep.subr.mxu0 0.0
    %253 = vmatpush1.msra.mxu0 0.0
    %254 = vmatprep.subr.mxu0 0.0
    %255 = vmatpush1.msra.mxu0 0.0
    %256 = vmatprep.subr.mxu0 0.0
    %257 = vmatpush1.msra.mxu0 0.0
    %258 = vmatprep.subr.mxu0 0.0
    %259 = vmatpush1.msra.mxu0 0.0
    %260 = vmatprep.subr.mxu0 0.0
    %261 = vmatpush1.msra.mxu0 0.0
    %262 = vmatprep.subr.mxu0 0.0
    %263 = vmatpush1.msra.mxu0 0.0
    %264 = vmatprep.subr.mxu0 0.0
    %265 = vmatpush1.msra.mxu0 0.0
    %266 = vmatprep.subr.mxu0 0.0
    %267 = vmatpush1.msra.mxu0 0.0
    %268 = vmatprep.subr.mxu0 0.0
    %269 = vmatpush1.msra.mxu0 0.0
    %270 = vmatprep.subr.mxu0 0.0
    %271 = vmatpush1.msra.mxu0 0.0
    %272 = vmatprep.subr.mxu0 0.0
    %273 = vmatpush1.msra.mxu0 0.0
    %274 = vmatprep.subr.mxu0 0.0
    %275 = vmatpush1.msra.mxu0 0.0
    %276 = vmatprep.subr.mxu0 0.0
    %277 = vmatpush1.msra.mxu0 0.0
    %278 = vmatprep.subr.mxu0 0.0
    %279 = vmatpush1.msra.mxu0 0.0
    %280 = vmatprep.subr.mxu0 0.0
    %281 = vmatpush1.msra.mxu0 0.0
    %282 = vmatprep.mubr.f32.mxu0 0.0
    %283 = vmatmul.mubr.f32.gmra.mrb[0].mxu0 %v216
    %v284 = vpop.f32.mrb[0].mxu0
    %v285 = vadd.f32 0.0, %v284
    %v286 = vpop.f32.mrb[0].mxu0
    %287 = vdwg.mxu0
    %288 = vxpose.xlu0.b32.start [1/16] %v177, 128
    %289 = vxpose.xlu0.b32.cont [2/16] 0.0, 128
    %290 = vxpose.xlu0.b32.cont [3/16] 0.0, 128
    %291 = vxpose.xlu0.b32.cont [4/16] 0.0, 128
    %292 = vxpose.xlu0.b32.cont [5/16] 0.0, 128
    %293 = vxpose.xlu0.b32.cont [6/16] 0.0, 128
    %294 = vxpose.xlu0.b32.cont [7/16] 0.0, 128
    %295 = vxpose.xlu0.b32.cont [8/16] 0.0, 128
    %296 = vxpose.xlu0.b32.cont [9/16] 0.0, 128
    %297 = vxpose.xlu0.b32.cont [10/16] 0.0, 128
    %298 = vxpose.xlu0.b32.cont [11/16] 0.0, 128
    %299 = vxpose.xlu0.b32.cont [12/16] 0.0, 128
    %300 = vxpose.xlu0.b32.cont [13/16] 0.0, 128
    %301 = vxpose.xlu0.b32.cont [14/16] 0.0, 128
    %302 = vxpose.xlu0.b32.cont [15/16] 0.0, 128
    %303 = vxpose.xlu0.b32.end [16/16] 0.0, 128
    %v304 = vpop.trf.xlu0
    %v305 = vpop.trf.xlu0
    %v306 = vpop.trf.xlu0
    %v307 = vpop.trf.xlu0
    %v308 = vpop.trf.xlu0
    %v309 = vpop.trf.xlu0
    %v310 = vpop.trf.xlu0
    %v311 = vpop.trf.xlu0
    %v312 = vpop.trf.xlu0
    %v313 = vpop.trf.xlu0
    %v314 = vpop.trf.xlu0
    %v315 = vpop.trf.xlu0
    %v316 = vpop.trf.xlu0
    %v317 = vpop.trf.xlu0
    %v318 = vpop.trf.xlu0
    %v319 = vpop.trf.xlu0
    %v321 = vsel %vm214, %v304, 0
    %323 = vmatprep.subr.mxu0 0.0
    %324 = vmatpush1.msra.mxu0 %v181
    %325 = vmatprep.subr.mxu0 0.0
    %326 = vmatpush1.msra.mxu0 0.0
    %327 = vmatprep.subr.mxu0 0.0
    %328 = vmatpush1.msra.mxu0 0.0
    %329 = vmatprep.subr.mxu0 0.0
    %330 = vmatpush1.msra.mxu0 0.0
    %331 = vmatprep.subr.mxu0 0.0
    %332 = vmatpush1.msra.mxu0 0.0
    %333 = vmatprep.subr.mxu0 0.0
    %334 = vmatpush1.msra.mxu0 0.0
    %335 = vmatprep.subr.mxu0 0.0
    %336 = vmatpush1.msra.mxu0 0.0
    %337 = vmatprep.subr.mxu0 0.0
    %338 = vmatpush1.msra.mxu0 0.0
    %339 = vmatprep.subr.mxu0 0.0
    %340 = vmatpush1.msra.mxu0 0.0
    %341 = vmatprep.subr.mxu0 0.0
    %342 = vmatpush1.msra.mxu0 0.0
    %343 = vmatprep.subr.mxu0 0.0
    %344 = vmatpush1.msra.mxu0 0.0
    %345 = vmatprep.subr.mxu0 0.0
    %346 = vmatpush1.msra.mxu0 0.0
    %347 = vmatprep.subr.mxu0 0.0
    %348 = vmatpush1.msra.mxu0 0.0
    %349 = vmatprep.subr.mxu0 0.0
    %350 = vmatpush1.msra.mxu0 0.0
    %351 = vmatprep.subr.mxu0 0.0
    %352 = vmatpush1.msra.mxu0 0.0
    %353 = vmatprep.subr.mxu0 0.0
    %354 = vmatpush1.msra.mxu0 0.0
    %355 = vmatprep.subr.mxu0 0.0
    %356 = vmatpush1.msra.mxu0 0.0
    %357 = vmatprep.subr.mxu0 0.0
    %358 = vmatpush1.msra.mxu0 0.0
    %359 = vmatprep.subr.mxu0 0.0
    %360 = vmatpush1.msra.mxu0 0.0
    %361 = vmatprep.subr.mxu0 0.0
    %362 = vmatpush1.msra.mxu0 0.0
    %363 = vmatprep.subr.mxu0 0.0
    %364 = vmatpush1.msra.mxu0 0.0
    %365 = vmatprep.subr.mxu0 0.0
    %366 = vmatpush1.msra.mxu0 0.0
    %367 = vmatprep.subr.mxu0 0.0
    %368 = vmatpush1.msra.mxu0 0.0
    %369 = vmatprep.subr.mxu0 0.0
    %370 = vmatpush1.msra.mxu0 0.0
    %371 = vmatprep.subr.mxu0 0.0
    %372 = vmatpush1.msra.mxu0 0.0
    %373 = vmatprep.subr.mxu0 0.0
    %374 = vmatpush1.msra.mxu0 0.0
    %375 = vmatprep.subr.mxu0 0.0
    %376 = vmatpush1.msra.mxu0 0.0
    %377 = vmatprep.subr.mxu0 0.0
    %378 = vmatpush1.msra.mxu0 0.0
    %379 = vmatprep.subr.mxu0 0.0
    %380 = vmatpush1.msra.mxu0 0.0
    %381 = vmatprep.subr.mxu0 0.0
    %382 = vmatpush1.msra.mxu0 0.0
    %383 = vmatprep.subr.mxu0 0.0
    %384 = vmatpush1.msra.mxu0 0.0
    %385 = vmatprep.subr.mxu0 0.0
    %386 = vmatpush1.msra.mxu0 0.0
    %387 = vmatprep.mubr.f32.mxu0 0.0
    %388 = vmatmul.mubr.f32.gmra.mrb[0].mxu0 %v321
    %v389 = vpop.f32.mrb[0].mxu0
    %v390 = vadd.f32 0.0, %v389
    %v391 = vpop.f32.mrb[0].mxu0
    %392 = vdwg.mxu0
    %v393 = vcombine.low %v285, %v390
    %v395 = vunpack.c.l.s4 1934713408
    %v396 = vunpack.c.0.s8 %v395
    %v397 = vlaneseq
    %v398 = vshrl.u32 %v397, 7
    %v399 = vsub.s32 %v396, %v398
    %v400 = vrot.slane %v393, %v399
    %v401 = vcombine.high %v400, 0.0
    %402 = vst [vmem:[#allocation8] sm:$0x3] %v400
    %403 = vst [vmem:[#allocation8 + $0x2] sm:$0x3] %v401
    // Predicated region
    $region26: #{attmodule_dir_forward.6} parent=1 // pred_check
      _
    $region27: #{attmodule_dir_forward.6} parent=1 // pred_check_branch
      %405 = sbr.rel (0) target = $region29
    $region28: #{attmodule_dir_forward.6} parent=1 // pred_region
      %s407 = ssub.s32 64, 64
      %408 = vsyncadd [#allocation4], %s407
      %s409 = sshll.u32 [#allocation8], 4
      %s410 = int_to_ptr.vmem [resolvable:$true] %s409
      %415 = dma.vmem_to_hbm [thread:$0]  %s410, 64, %s3, [#allocation4], 32, 32, 2
    $region29: #{attmodule_dir_forward.6} parent=1 // pred_fallthru
      _
    // Predicated region
    $region30: #{attmodule_dir_forward.6} parent=1 // pred_check
      _
    $region31: #{attmodule_dir_forward.6} parent=1 // pred_check_branch
      %417 = sbr.rel (0) target = $region33
    $region32: #{attmodule_dir_forward.6} parent=1 // pred_region
      %418 = dma.done [#allocation4], 64
    $region33: #{attmodule_dir_forward.6} parent=1 // pred_fallthru
      _
    %419 = vsyncpa [#allocation3], 1
    %420 = vsyncpa [#allocation6], 1
    %421 = vsyncpa [#allocation4], 1

// kernel: attmodule_dir_forward.7
$region0: #{attmodule_dir_forward.7}
  #allocation0 [shape = 'u32[]', space=smem, size = 0x4, offset = 0x4, fixed_abs, tag = 'smem constant byte address 0x4 - core index']
  #allocation1 [shape = 'u32[144,128]{1,0:T(1,128)}', space=vmem, size = 0x12000, scoped, tag = 'internal scratch']
  %s0 = inlined_call_operand.hbm [shape: bf16[2,128], index: 0, kind: input, shape index: {}]
  %s1 = inlined_call_operand.hbm [shape: bf16[2,2,8,128], index: 1, kind: input, shape index: {}]
  %s2 = inlined_call_operand.hbm [shape: bf16[2,2,8,128], index: 2, kind: input, shape index: {}]
  %s3 = inlined_call_operand.hbm [shape: f32[2,2,128], index: 3, kind: output, shape index: {}]
  %s4 = sld [smem:[#allocation0]]
  $region34: #{attmodule_dir_forward.7} parent=0
    _
  %s6 = ssub.s32 1, %s4
  %s7 = scalar_select 0, %s6, %s4
  $region1: #{attmodule_dir_forward.7} parent=0
    #allocation2 [shape = 'u8[512]{0}', space=vmem, size = 0x400, scoped, tag = 'input window, operand 0, single buffered']
    #allocation3 [shape = 's32[1]{0}', space=sflag, size = 0x4, scoped, tag = 'scoped memory for attmodule_dir_forward.7']
    #allocation4 [shape = 's32[1]{0}', space=sflag, size = 0x4, scoped, tag = 'scoped memory for attmodule_dir_forward.7']
    #allocation5 [shape = 'u8[4096]{0}', space=vmem, size = 0x1000, scoped, tag = 'input window, operand 1, single buffered']
    #allocation6 [shape = 's32[1]{0}', space=sflag, size = 0x4, scoped, tag = 'scoped memory for attmodule_dir_forward.7']
    #allocation7 [shape = 'u8[4096]{0}', space=vmem, size = 0x1000, scoped, tag = 'input window, operand 2, single buffered']
    #allocation8 [shape = 'u8[2048]{0}', space=vmem, size = 0x800, scoped, tag = 'output window, operand 0, single buffered']
    %8 = vsyncpa [#allocation3], 0
    %9 = vsyncpa [#allocation6], 0
    %10 = vsyncpa [#allocation4], 0
    // Predicated region
    $region2: #{attmodule_dir_forward.7} parent=1 // pred_check
      _
    $region3: #{attmodule_dir_forward.7} parent=1 // pred_check_branch
      %12 = sbr.rel (0) target = $region5
    $region4: #{attmodule_dir_forward.7} parent=1 // pred_region
      %s14 = ssub.s32 16, 16
      %15 = vsyncadd [#allocation3], %s14
      %s17 = sshll.u32 [#allocation2], 4
      %s18 = int_to_ptr.vmem [resolvable:$true] %s17
      %20 = dma.hbm_to_vmem [thread:$0]  %s0, 16, %s18, [#allocation3]
    $region5: #{attmodule_dir_forward.7} parent=1 // pred_fallthru
      _
    // Predicated region
    $region6: #{attmodule_dir_forward.7} parent=1 // pred_check
      _
    $region7: #{attmodule_dir_forward.7} parent=1 // pred_check_branch
      %22 = sbr.rel (0) target = $region9
    $region8: #{attmodule_dir_forward.7} parent=1 // pred_region
      %s24 = ssub.s32 128, 128
      %25 = vsyncadd [#allocation6], %s24
      %s26 = sshll.u32 [#allocation5], 4
      %s27 = int_to_ptr.vmem [resolvable:$true] %s26
      %32 = dma.hbm_to_vmem [thread:$0]  %s1, 128, %s27, [#allocation6], 128, 64, 4
    $region9: #{attmodule_dir_forward.7} parent=1 // pred_fallthru
      _
    // Predicated region
    $region10: #{attmodule_dir_forward.7} parent=1 // pred_check
      _
    $region11: #{attmodule_dir_forward.7} parent=1 // pred_check_branch
      %34 = sbr.rel (0) target = $region13
    $region12: #{attmodule_dir_forward.7} parent=1 // pred_region
      %s36 = ssub.s32 128, 128
      %37 = vsyncadd [#allocation6], %s36
      %s38 = sshll.u32 [#allocation7], 4
      %s39 = int_to_ptr.vmem [resolvable:$true] %s38
      %44 = dma.hbm_to_vmem [thread:$0]  %s2, 128, %s39, [#allocation6], 128, 64, 4
    $region13: #{attmodule_dir_forward.7} parent=1 // pred_fallthru
      _
    // Predicated region
    $region14: #{attmodule_dir_forward.7} parent=1 // pred_check
      _
    $region15: #{attmodule_dir_forward.7} parent=1 // pred_check_branch
      %46 = sbr.rel (0) target = $region17
    $region16: #{attmodule_dir_forward.7} parent=1 // pred_region
      %47 = dma.done [#allocation3], 16
    $region17: #{attmodule_dir_forward.7} parent=1 // pred_fallthru
      _
    // Predicated region
    $region18: #{attmodule_dir_forward.7} parent=1 // pred_check
      _
    $region19: #{attmodule_dir_forward.7} parent=1 // pred_check_branch
      %49 = sbr.rel (0) target = $region21
    $region20: #{attmodule_dir_forward.7} parent=1 // pred_region
      %50 = dma.done [#allocation6], 128
    $region21: #{attmodule_dir_forward.7} parent=1 // pred_fallthru
      _
    // Predicated region
    $region22: #{attmodule_dir_forward.7} parent=1 // pred_check
      _
    $region23: #{attmodule_dir_forward.7} parent=1 // pred_check_branch
      %52 = sbr.rel (0) target = $region25
    $region24: #{attmodule_dir_forward.7} parent=1 // pred_region
      %53 = dma.done [#allocation6], 128
    $region25: #{attmodule_dir_forward.7} parent=1 // pred_fallthru
      _
    %v54 = vld [vmem:[#allocation2] sm:$0x1]
    %v55 = vunpack.c.l.bf16 %v54
    %v56 = vld [vmem:[#allocation7] sm:$0xf]
    %v57 = vld [vmem:[#allocation7 + $0x4] sm:$0xf]
    %v58 = vunpack.c.l.bf16 %v56
    %v59 = vunpack.c.l.bf16 %v57
    %60 = vmatprep.subr.mxu0 0.0
    %61 = vmatpush1.xpose.msra.mxu0 %v55
    %62 = vmatprep.subr.mxu0 0.0
    %63 = vmatpush1.xpose.msra.mxu0 0.0
    %64 = vmatprep.subr.mxu0 0.0
    %65 = vmatpush1.xpose.msra.mxu0 0.0
    %66 = vmatprep.subr.mxu0 0.0
    %67 = vmatpush1.xpose.msra.mxu0 0.0
    %68 = vmatprep.subr.mxu0 0.0
    %69 = vmatpush1.xpose.msra.mxu0 0.0
    %70 = vmatprep.subr.mxu0 0.0
    %71 = vmatpush1.xpose.msra.mxu0 0.0
    %72 = vmatprep.subr.mxu0 0.0
    %73 = vmatpush1.xpose.msra.mxu0 0.0
    %74 = vmatprep.subr.mxu0 0.0
    %75 = vmatpush1.xpose.msra.mxu0 0.0
    %76 = vmatprep.subr.mxu0 0.0
    %77 = vmatpush1.xpose.msra.mxu0 0.0
    %78 = vmatprep.subr.mxu0 0.0
    %79 = vmatpush1.xpose.msra.mxu0 0.0
    %80 = vmatprep.subr.mxu0 0.0
    %81 = vmatpush1.xpose.msra.mxu0 0.0
    %82 = vmatprep.subr.mxu0 0.0
    %83 = vmatpush1.xpose.msra.mxu0 0.0
    %84 = vmatprep.subr.mxu0 0.0
    %85 = vmatpush1.xpose.msra.mxu0 0.0
    %86 = vmatprep.subr.mxu0 0.0
    %87 = vmatpush1.xpose.msra.mxu0 0.0
    %88 = vmatprep.subr.mxu0 0.0
    %89 = vmatpush1.xpose.msra.mxu0 0.0
    %90 = vmatprep.subr.mxu0 0.0
    %91 = vmatpush1.xpose.msra.mxu0 0.0
    %92 = vmatprep.subr.mxu0 0.0
    %93 = vmatpush1.xpose.msra.mxu0 0.0
    %94 = vmatprep.subr.mxu0 0.0
    %95 = vmatpush1.xpose.msra.mxu0 0.0
    %96 = vmatprep.subr.mxu0 0.0
    %97 = vmatpush1.xpose.msra.mxu0 0.0
    %98 = vmatprep.subr.mxu0 0.0
    %99 = vmatpush1.xpose.msra.mxu0 0.0
    %100 = vmatprep.subr.mxu0 0.0
    %101 = vmatpush1.xpose.msra.mxu0 0.0
    %102 = vmatprep.subr.mxu0 0.0
    %103 = vmatpush1.xpose.msra.mxu0 0.0
    %104 = vmatprep.subr.mxu0 0.0
    %105 = vmatpush1.xpose.msra.mxu0 0.0
    %106 = vmatprep.subr.mxu0 0.0
    %107 = vmatpush1.xpose.msra.mxu0 0.0
    %108 = vmatprep.subr.mxu0 0.0
    %109 = vmatpush1.xpose.msra.mxu0 0.0
    %110 = vmatprep.subr.mxu0 0.0
    %111 = vmatpush1.xpose.msra.mxu0 0.0
    %112 = vmatprep.subr.mxu0 0.0
    %113 = vmatpush1.xpose.msra.mxu0 0.0
    %114 = vmatprep.subr.mxu0 0.0
    %115 = vmatpush1.xpose.msra.mxu0 0.0
    %116 = vmatprep.subr.mxu0 0.0
    %117 = vmatpush1.xpose.msra.mxu0 0.0
    %118 = vmatprep.subr.mxu0 0.0
    %119 = vmatpush1.xpose.msra.mxu0 0.0
    %120 = vmatprep.subr.mxu0 0.0
    %121 = vmatpush1.xpose.msra.mxu0 0.0
    %122 = vmatprep.subr.mxu0 0.0
    %123 = vmatpush1.xpose.msra.mxu0 0.0
    %124 = vmatprep.mubr.f32.mxu0 0.0
    %125 = vmatmul.mubr.f32.gmra.mrb[0].mxu0 %v58
    %v126 = vpop.f32.mrb[0].mxu0
    %v127 = vadd.f32 0.0, %v126
    %v128 = vpop.f32.mrb[0].mxu0
    %129 = vmatprep.mubr.f32.mxu0 0.0
    %130 = vmatmul.mubr.f32.gmra.mrb[0].mxu0 %v59
    %v131 = vpop.f32.mrb[0].mxu0
    %v132 = vadd.f32 0.0, %v131
    %v133 = vpop.f32.mrb[0].mxu0
    %134 = vdwg.mxu0
    %vm135 = vcmask 15360
    %v136 = vsel %vm135, %v127, -inf
    %v137 = vrot.slane %v136, 4
    %v138 = vmax.f32 %v136, %v137
    %v139 = vrot.slane %v138, 2
    %v140 = vmax.f32 %v138, %v139
    %v141 = vrot.slane %v140, 1
    %v142 = vmax.f32 %v140, %v141
    %v143 = vsel %vm135, %v132, -inf
    %v144 = vrot.slane %v143, 4
    %v145 = vmax.f32 %v143, %v144
    %v146 = vrot.slane %v145, 2
    %v147 = vmax.f32 %v145, %v146
    %v148 = vrot.slane %v147, 1
    %v149 = vmax.f32 %v147, %v148
    %v150 = vsub.f32 %v127, %v142
    %v151 = vsub.f32 %v132, %v149
    %v152 = vmul.f32 %v150, 1.442695
    %v153 = vpow.pop %v152
    %v154 = vmul.f32 %v151, 1.442695
    %v155 = vpow.pop %v154
    %v156 = vsel %vm135, %v153, 0.0
    %v157 = vrot.slane %v156, 4
    %v158 = vadd.f32 %v156, %v157
    %v159 = vrot.slane %v158, 2
    %v160 = vadd.f32 %v158, %v159
    %v161 = vrot.slane %v160, 1
    %v162 = vadd.f32 %v160, %v161
    %v163 = vsel %vm135, %v155, 0.0
    %v164 = vrot.slane %v163, 4
    %v165 = vadd.f32 %v163, %v164
    %v166 = vrot.slane %v165, 2
    %v167 = vadd.f32 %v165, %v166
    %v168 = vrot.slane %v167, 1
    %v169 = vadd.f32 %v167, %v168
    %v170 = vrcp.pop %v162
    %v171 = vmul.f32 1.0, %v170
    %v172 = vrcp.pop %v169
    %v173 = vmul.f32 1.0, %v172
    %v174 = vmul.f32 %v153, %v171
    %v175 = vmul.f32 %v155, %v173
    %v176 = vld [vmem:[#allocation5] sm:$0xf]
    %v177 = vld [vmem:[#allocation5 + $0x4] sm:$0xf]
    %v178 = vunpack.c.l.bf16 %v176
    %v179 = vunpack.c.l.bf16 %v177
    %180 = vxpose.xlu0.b32.start [1/16] %v174, 128
    %181 = vxpose.xlu0.b32.cont [2/16] 0.0, 128
    %182 = vxpose.xlu0.b32.cont [3/16] 0.0, 128
    %183 = vxpose.xlu0.b32.cont [4/16] 0.0, 128
    %184 = vxpose.xlu0.b32.cont [5/16] 0.0, 128
    %185 = vxpose.xlu0.b32.cont [6/16] 0.0, 128
    %186 = vxpose.xlu0.b32.cont [7/16] 0.0, 128
    %187 = vxpose.xlu0.b32.cont [8/16] 0.0, 128
    %188 = vxpose.xlu0.b32.cont [9/16] 0.0, 128
    %189 = vxpose.xlu0.b32.cont [10/16] 0.0, 128
    %190 = vxpose.xlu0.b32.cont [11/16] 0.0, 128
    %191 = vxpose.xlu0.b32.cont [12/16] 0.0, 128
    %192 = vxpose.xlu0.b32.cont [13/16] 0.0, 128
    %193 = vxpose.xlu0.b32.cont [14/16] 0.0, 128
    %194 = vxpose.xlu0.b32.cont [15/16] 0.0, 128
    %195 = vxpose.xlu0.b32.end [16/16] 0.0, 128
    %v196 = vpop.trf.xlu0
    %v197 = vpop.trf.xlu0
    %v198 = vpop.trf.xlu0
    %v199 = vpop.trf.xlu0
    %v200 = vpop.trf.xlu0
    %v201 = vpop.trf.xlu0
    %v202 = vpop.trf.xlu0
    %v203 = vpop.trf.xlu0
    %v204 = vpop.trf.xlu0
    %v205 = vpop.trf.xlu0
    %v206 = vpop.trf.xlu0
    %v207 = vpop.trf.xlu0
    %v208 = vpop.trf.xlu0
    %v209 = vpop.trf.xlu0
    %v210 = vpop.trf.xlu0
    %v211 = vpop.trf.xlu0
    %vm212 = vcmask 64512
    %v214 = vsel %vm212, %v196, 0
    %216 = vmatprep.subr.mxu0 0.0
    %217 = vmatpush1.msra.mxu0 %v178
    %218 = vmatprep.subr.mxu0 0.0
    %219 = vmatpush1.msra.mxu0 0.0
    %220 = vmatprep.subr.mxu0 0.0
    %221 = vmatpush1.msra.mxu0 0.0
    %222 = vmatprep.subr.mxu0 0.0
    %223 = vmatpush1.msra.mxu0 0.0
    %224 = vmatprep.subr.mxu0 0.0
    %225 = vmatpush1.msra.mxu0 0.0
    %226 = vmatprep.subr.mxu0 0.0
    %227 = vmatpush1.msra.mxu0 0.0
    %228 = vmatprep.subr.mxu0 0.0
    %229 = vmatpush1.msra.mxu0 0.0
    %230 = vmatprep.subr.mxu0 0.0
    %231 = vmatpush1.msra.mxu0 0.0
    %232 = vmatprep.subr.mxu0 0.0
    %233 = vmatpush1.msra.mxu0 0.0
    %234 = vmatprep.subr.mxu0 0.0
    %235 = vmatpush1.msra.mxu0 0.0
    %236 = vmatprep.subr.mxu0 0.0
    %237 = vmatpush1.msra.mxu0 0.0
    %238 = vmatprep.subr.mxu0 0.0
    %239 = vmatpush1.msra.mxu0 0.0
    %240 = vmatprep.subr.mxu0 0.0
    %241 = vmatpush1.msra.mxu0 0.0
    %242 = vmatprep.subr.mxu0 0.0
    %243 = vmatpush1.msra.mxu0 0.0
    %244 = vmatprep.subr.mxu0 0.0
    %245 = vmatpush1.msra.mxu0 0.0
    %246 = vmatprep.subr.mxu0 0.0
    %247 = vmatpush1.msra.mxu0 0.0
    %248 = vmatprep.subr.mxu0 0.0
    %249 = vmatpush1.msra.mxu0 0.0
    %250 = vmatprep.subr.mxu0 0.0
    %251 = vmatpush1.msra.mxu0 0.0
    %252 = vmatprep.subr.mxu0 0.0
    %253 = vmatpush1.msra.mxu0 0.0
    %254 = vmatprep.subr.mxu0 0.0
    %255 = vmatpush1.msra.mxu0 0.0
    %256 = vmatprep.subr.mxu0 0.0
    %257 = vmatpush1.msra.mxu0 0.0
    %258 = vmatprep.subr.mxu0 0.0
    %259 = vmatpush1.msra.mxu0 0.0
    %260 = vmatprep.subr.mxu0 0.0
    %261 = vmatpush1.msra.mxu0 0.0
    %262 = vmatprep.subr.mxu0 0.0
    %263 = vmatpush1.msra.mxu0 0.0
    %264 = vmatprep.subr.mxu0 0.0
    %265 = vmatpush1.msra.mxu0 0.0
    %266 = vmatprep.subr.mxu0 0.0
    %267 = vmatpush1.msra.mxu0 0.0
    %268 = vmatprep.subr.mxu0 0.0
    %269 = vmatpush1.msra.mxu0 0.0
    %270 = vmatprep.subr.mxu0 0.0
    %271 = vmatpush1.msra.mxu0 0.0
    %272 = vmatprep.subr.mxu0 0.0
    %273 = vmatpush1.msra.mxu0 0.0
    %274 = vmatprep.subr.mxu0 0.0
    %275 = vmatpush1.msra.mxu0 0.0
    %276 = vmatprep.subr.mxu0 0.0
    %277 = vmatpush1.msra.mxu0 0.0
    %278 = vmatprep.subr.mxu0 0.0
    %279 = vmatpush1.msra.mxu0 0.0
    %280 = vmatprep.mubr.f32.mxu0 0.0
    %281 = vmatmul.mubr.f32.gmra.mrb[0].mxu0 %v214
    %v282 = vpop.f32.mrb[0].mxu0
    %v283 = vadd.f32 0.0, %v282
    %v284 = vpop.f32.mrb[0].mxu0
    %285 = vdwg.mxu0
    %286 = vxpose.xlu0.b32.start [1/16] %v175, 128
    %287 = vxpose.xlu0.b32.cont [2/16] 0.0, 128
    %288 = vxpose.xlu0.b32.cont [3/16] 0.0, 128
    %289 = vxpose.xlu0.b32.cont [4/16] 0.0, 128
    %290 = vxpose.xlu0.b32.cont [5/16] 0.0, 128
    %291 = vxpose.xlu0.b32.cont [6/16] 0.0, 128
    %292 = vxpose.xlu0.b32.cont [7/16] 0.0, 128
    %293 = vxpose.xlu0.b32.cont [8/16] 0.0, 128
    %294 = vxpose.xlu0.b32.cont [9/16] 0.0, 128
    %295 = vxpose.xlu0.b32.cont [10/16] 0.0, 128
    %296 = vxpose.xlu0.b32.cont [11/16] 0.0, 128
    %297 = vxpose.xlu0.b32.cont [12/16] 0.0, 128
    %298 = vxpose.xlu0.b32.cont [13/16] 0.0, 128
    %299 = vxpose.xlu0.b32.cont [14/16] 0.0, 128
    %300 = vxpose.xlu0.b32.cont [15/16] 0.0, 128
    %301 = vxpose.xlu0.b32.end [16/16] 0.0, 128
    %v302 = vpop.trf.xlu0
    %v303 = vpop.trf.xlu0
    %v304 = vpop.trf.xlu0
    %v305 = vpop.trf.xlu0
    %v306 = vpop.trf.xlu0
    %v307 = vpop.trf.xlu0
    %v308 = vpop.trf.xlu0
    %v309 = vpop.trf.xlu0
    %v310 = vpop.trf.xlu0
    %v311 = vpop.trf.xlu0
    %v312 = vpop.trf.xlu0
    %v313 = vpop.trf.xlu0
    %v314 = vpop.trf.xlu0
    %v315 = vpop.trf.xlu0
    %v316 = vpop.trf.xlu0
    %v317 = vpop.trf.xlu0
    %v319 = vsel %vm212, %v302, 0
    %321 = vmatprep.subr.mxu0 0.0
    %322 = vmatpush1.msra.mxu0 %v179
    %323 = vmatprep.subr.mxu0 0.0
    %324 = vmatpush1.msra.mxu0 0.0
    %325 = vmatprep.subr.mxu0 0.0
    %326 = vmatpush1.msra.mxu0 0.0
    %327 = vmatprep.subr.mxu0 0.0
    %328 = vmatpush1.msra.mxu0 0.0
    %329 = vmatprep.subr.mxu0 0.0
    %330 = vmatpush1.msra.mxu0 0.0
    %331 = vmatprep.subr.mxu0 0.0
    %332 = vmatpush1.msra.mxu0 0.0
    %333 = vmatprep.subr.mxu0 0.0
    %334 = vmatpush1.msra.mxu0 0.0
    %335 = vmatprep.subr.mxu0 0.0
    %336 = vmatpush1.msra.mxu0 0.0
    %337 = vmatprep.subr.mxu0 0.0
    %338 = vmatpush1.msra.mxu0 0.0
    %339 = vmatprep.subr.mxu0 0.0
    %340 = vmatpush1.msra.mxu0 0.0
    %341 = vmatprep.subr.mxu0 0.0
    %342 = vmatpush1.msra.mxu0 0.0
    %343 = vmatprep.subr.mxu0 0.0
    %344 = vmatpush1.msra.mxu0 0.0
    %345 = vmatprep.subr.mxu0 0.0
    %346 = vmatpush1.msra.mxu0 0.0
    %347 = vmatprep.subr.mxu0 0.0
    %348 = vmatpush1.msra.mxu0 0.0
    %349 = vmatprep.subr.mxu0 0.0
    %350 = vmatpush1.msra.mxu0 0.0
    %351 = vmatprep.subr.mxu0 0.0
    %352 = vmatpush1.msra.mxu0 0.0
    %353 = vmatprep.subr.mxu0 0.0
    %354 = vmatpush1.msra.mxu0 0.0
    %355 = vmatprep.subr.mxu0 0.0
    %356 = vmatpush1.msra.mxu0 0.0
    %357 = vmatprep.subr.mxu0 0.0
    %358 = vmatpush1.msra.mxu0 0.0
    %359 = vmatprep.subr.mxu0 0.0
    %360 = vmatpush1.msra.mxu0 0.0
    %361 = vmatprep.subr.mxu0 0.0
    %362 = vmatpush1.msra.mxu0 0.0
    %363 = vmatprep.subr.mxu0 0.0
    %364 = vmatpush1.msra.mxu0 0.0
    %365 = vmatprep.subr.mxu0 0.0
    %366 = vmatpush1.msra.mxu0 0.0
    %367 = vmatprep.subr.mxu0 0.0
    %368 = vmatpush1.msra.mxu0 0.0
    %369 = vmatprep.subr.mxu0 0.0
    %370 = vmatpush1.msra.mxu0 0.0
    %371 = vmatprep.subr.mxu0 0.0
    %372 = vmatpush1.msra.mxu0 0.0
    %373 = vmatprep.subr.mxu0 0.0
    %374 = vmatpush1.msra.mxu0 0.0
    %375 = vmatprep.subr.mxu0 0.0
    %376 = vmatpush1.msra.mxu0 0.0
    %377 = vmatprep.subr.mxu0 0.0
    %378 = vmatpush1.msra.mxu0 0.0
    %379 = vmatprep.subr.mxu0 0.0
    %380 = vmatpush1.msra.mxu0 0.0
    %381 = vmatprep.subr.mxu0 0.0
    %382 = vmatpush1.msra.mxu0 0.0
    %383 = vmatprep.subr.mxu0 0.0
    %384 = vmatpush1.msra.mxu0 0.0
    %385 = vmatprep.mubr.f32.mxu0 0.0
    %386 = vmatmul.mubr.f32.gmra.mrb[0].mxu0 %v319
    %v387 = vpop.f32.mrb[0].mxu0
    %v388 = vadd.f32 0.0, %v387
    %v389 = vpop.f32.mrb[0].mxu0
    %390 = vdwg.mxu0
    %391 = vst [vmem:[#allocation8] sm:$0x3] %v283
    %392 = vst [vmem:[#allocation8 + $0x2] sm:$0x3] %v388
    // Predicated region
    $region26: #{attmodule_dir_forward.7} parent=1 // pred_check
      _
    $region27: #{attmodule_dir_forward.7} parent=1 // pred_check_branch
      %394 = sbr.rel (0) target = $region29
    $region28: #{attmodule_dir_forward.7} parent=1 // pred_region
      %s396 = ssub.s32 64, 64
      %397 = vsyncadd [#allocation4], %s396
      %s398 = sshll.u32 [#allocation8], 4
      %s399 = int_to_ptr.vmem [resolvable:$true] %s398
      %404 = dma.vmem_to_hbm [thread:$0]  %s399, 64, %s3, [#allocation4], 32, 32, 2
    $region29: #{attmodule_dir_forward.7} parent=1 // pred_fallthru
      _
    // Predicated region
    $region30: #{attmodule_dir_forward.7} parent=1 // pred_check
      _
    $region31: #{attmodule_dir_forward.7} parent=1 // pred_check_branch
      %406 = sbr.rel (0) target = $region33
    $region32: #{attmodule_dir_forward.7} parent=1 // pred_region
      %407 = dma.done [#allocation4], 64
    $region33: #{attmodule_dir_forward.7} parent=1 // pred_fallthru
      _
    %408 = vsyncpa [#allocation3], 1
    %409 = vsyncpa [#allocation6], 1
    %410 = vsyncpa [#allocation4], 1

// kernel: attmodule_dir_forward.5
$region0: #{attmodule_dir_forward.5}
  #allocation0 [shape = 'u32[]', space=smem, size = 0x4, offset = 0x4, fixed_abs, tag = 'smem constant byte address 0x4 - core index']
  #allocation1 [shape = 'u32[144,128]{1,0:T(1,128)}', space=vmem, size = 0x12000, scoped, tag = 'internal scratch']
  %s0 = inlined_call_operand.hbm [shape: bf16[4,8,128], index: 0, kind: input, shape index: {}]
  %s1 = inlined_call_operand.hbm [shape: bf16[4,8,128], index: 1, kind: input, shape index: {}]
  %s2 = inlined_call_operand.hbm [shape: bf16[128,128], index: 2, kind: input, shape index: {}]
  %s3 = inlined_call_operand.hbm [shape: f32[1,128], index: 3, kind: input, shape index: {}]
  %s4 = inlined_call_operand.hbm [shape: f32[4,128], index: 4, kind: output, shape index: {0}]
  %s5 = inlined_call_operand.hbm [shape: bf16[4,128], index: 5, kind: output, shape index: {1}]
  %6 = xla_tuple %s4, %s5
  %s7 = sld [smem:[#allocation0]]
  $region50: #{attmodule_dir_forward.5} parent=0
    _
  %s9 = ssub.s32 1, %s7
  %s10 = scalar_select 0, %s9, %s7
  $region1: #{attmodule_dir_forward.5} parent=0
    #allocation2 [shape = 'u8[8192]{0}', space=vmem, size = 0x2000, scoped, tag = 'input window, operand 0, single buffered']
    #allocation3 [shape = 's32[1]{0}', space=sflag, size = 0x4, scoped, tag = 'scoped memory for attmodule_dir_forward.5']
    #allocation4 [shape = 's32[1]{0}', space=sflag, size = 0x4, scoped, tag = 'scoped memory for attmodule_dir_forward.5']
    #allocation5 [shape = 'u8[8192]{0}', space=vmem, size = 0x2000, scoped, tag = 'input window, operand 1, single buffered']
    #allocation6 [shape = 's32[1]{0}', space=sflag, size = 0x4, scoped, tag = 'scoped memory for attmodule_dir_forward.5']
    #allocation7 [shape = 'u8[32768]{0}', space=vmem, size = 0x8000, scoped, tag = 'input window, operand 2, single buffered']
    #allocation8 [shape = 'u8[512]{0}', space=vmem, size = 0x400, scoped, tag = 'input window, operand 3, single buffered']
    #allocation9 [shape = 's32[1]{0}', space=sflag, size = 0x4, scoped, tag = 'scoped memory for attmodule_dir_forward.5']
    #allocation10 [shape = 'u8[2048]{0}', space=vmem, size = 0x800, scoped, tag = 'output window, operand 0, single buffered']
    #allocation11 [shape = 'u8[1024]{0}', space=vmem, size = 0x400, scoped, tag = 'output window, operand 1, single buffered']
    #allocation12 [shape = 's32[1]{0}', space=sflag, size = 0x4, scoped, tag = 'scoped memory for attmodule_dir_forward.5']
    %11 = vsyncpa [#allocation3], 0
    %12 = vsyncpa [#allocation6], 0
    %13 = vsyncpa [#allocation9], 0
    %14 = vsyncpa [#allocation4], 0
    %15 = vsyncpa [#allocation12], 0
    // Predicated region
    $region2: #{attmodule_dir_forward.5} parent=1 // pred_check
      _
    $region3: #{attmodule_dir_forward.5} parent=1 // pred_check_branch
      %17 = sbr.rel (0) target = $region5
    $region4: #{attmodule_dir_forward.5} parent=1 // pred_region
      %s19 = ssub.s32 256, 256
      %20 = vsyncadd [#allocation3], %s19
      %s21 = sshll.u32 [#allocation2], 4
      %s22 = int_to_ptr.vmem [resolvable:$true] %s21
      %27 = dma.hbm_to_vmem [thread:$0]  %s0, 256, %s22, [#allocation3], 64, 64, 4
    $region5: #{attmodule_dir_forward.5} parent=1 // pred_fallthru
      _
    // Predicated region
    $region6: #{attmodule_dir_forward.5} parent=1 // pred_check
      _
    $region7: #{attmodule_dir_forward.5} parent=1 // pred_check_branch
      %29 = sbr.rel (0) target = $region9
    $region8: #{attmodule_dir_forward.5} parent=1 // pred_region
      %s31 = ssub.s32 256, 256
      %32 = vsyncadd [#allocation6], %s31
      %s33 = sshll.u32 [#allocation5], 4
      %s34 = int_to_ptr.vmem [resolvable:$true] %s33
      %39 = dma.hbm_to_vmem [thread:$0]  %s1, 256, %s34, [#allocation6], 64, 64, 4
    $region9: #{attmodule_dir_forward.5} parent=1 // pred_fallthru
      _
    // Predicated region
    $region10: #{attmodule_dir_forward.5} parent=1 // pred_check
      _
    $region11: #{attmodule_dir_forward.5} parent=1 // pred_check_branch
      %41 = sbr.rel (0) target = $region13
    $region12: #{attmodule_dir_forward.5} parent=1 // pred_region
      %s43 = ssub.s32 1024, 1024
      %44 = vsyncadd [#allocation6], %s43
      %s45 = sshll.u32 [#allocation7], 4
      %s46 = int_to_ptr.vmem [resolvable:$true] %s45
      %51 = dma.hbm_to_vmem [thread:$0]  %s2, 1024, %s46, [#allocation6], 64, 64, 4
    $region13: #{attmodule_dir_forward.5} parent=1 // pred_fallthru
      _
    // Predicated region
    $region14: #{attmodule_dir_forward.5} parent=1 // pred_check
      _
    $region15: #{attmodule_dir_forward.5} parent=1 // pred_check_branch
      %53 = sbr.rel (0) target = $region17
    $region16: #{attmodule_dir_forward.5} parent=1 // pred_region
      %s55 = ssub.s32 16, 16
      %56 = vsyncadd [#allocation9], %s55
      %s58 = sshll.u32 [#allocation8], 4
      %s59 = int_to_ptr.vmem [resolvable:$true] %s58
      %61 = dma.hbm_to_vmem [thread:$0]  %s3, 16, %s59, [#allocation9]
    $region17: #{attmodule_dir_forward.5} parent=1 // pred_fallthru
      _
    // Predicated region
    $region18: #{attmodule_dir_forward.5} parent=1 // pred_check
      _
    $region19: #{attmodule_dir_forward.5} parent=1 // pred_check_branch
      %63 = sbr.rel (0) target = $region21
    $region20: #{attmodule_dir_forward.5} parent=1 // pred_region
      %64 = dma.done [#allocation3], 256
    $region21: #{attmodule_dir_forward.5} parent=1 // pred_fallthru
      _
    // Predicated region
    $region22: #{attmodule_dir_forward.5} parent=1 // pred_check
      _
    $region23: #{attmodule_dir_forward.5} parent=1 // pred_check_branch
      %66 = sbr.rel (0) target = $region25
    $region24: #{attmodule_dir_forward.5} parent=1 // pred_region
      %67 = dma.done [#allocation6], 256
    $region25: #{attmodule_dir_forward.5} parent=1 // pred_fallthru
      _
    // Predicated region
    $region26: #{attmodule_dir_forward.5} parent=1 // pred_check
      _
    $region27: #{attmodule_dir_forward.5} parent=1 // pred_check_branch
      %69 = sbr.rel (0) target = $region29
    $region28: #{attmodule_dir_forward.5} parent=1 // pred_region
      %70 = dma.done [#allocation6], 1024
    $region29: #{attmodule_dir_forward.5} parent=1 // pred_fallthru
      _
    // Predicated region
    $region30: #{attmodule_dir_forward.5} parent=1 // pred_check
      _
    $region31: #{attmodule_dir_forward.5} parent=1 // pred_check_branch
      %72 = sbr.rel (0) target = $region33
    $region32: #{attmodule_dir_forward.5} parent=1 // pred_region
      %73 = dma.done [#allocation9], 16
    $region33: #{attmodule_dir_forward.5} parent=1 // pred_fallthru
      _
    %v74 = vld [vmem:[#allocation5] sm:$0xf]
    %v75 = vld [vmem:[#allocation5 + $0x4] sm:$0xf]
    %v76 = vld [vmem:[#allocation5 + $0x8] sm:$0xf]
    %v77 = vld [vmem:[#allocation5 + $0xc] sm:$0xf]
    %v78 = vunpack.c.l.bf16 %v74
    %v79 = vunpack.c.l.bf16 %v75
    %v80 = vunpack.c.l.bf16 %v76
    %v81 = vunpack.c.l.bf16 %v77
    %v82 = vrot.slane %v78, 4
    %v83 = vadd.f32 %v78, %v82
    %v84 = vrot.slane %v83, 2
    %v85 = vadd.f32 %v83, %v84
    %v86 = vrot.slane %v85, 1
    %v87 = vadd.f32 %v85, %v86
    %v88 = vrot.slane %v79, 4
    %v89 = vadd.f32 %v79, %v88
    %v90 = vrot.slane %v89, 2
    %v91 = vadd.f32 %v89, %v90
    %v92 = vrot.slane %v91, 1
    %v93 = vadd.f32 %v91, %v92
    %v94 = vrot.slane %v80, 4
    %v95 = vadd.f32 %v80, %v94
    %v96 = vrot.slane %v95, 2
    %v97 = vadd.f32 %v95, %v96
    %v98 = vrot.slane %v97, 1
    %v99 = vadd.f32 %v97, %v98
    %v100 = vrot.slane %v81, 4
    %v101 = vadd.f32 %v81, %v100
    %v102 = vrot.slane %v101, 2
    %v103 = vadd.f32 %v101, %v102
    %v104 = vrot.slane %v103, 1
    %v105 = vadd.f32 %v103, %v104
    %v106 = vrcp.pop 8.0
    %v107 = vmul.f32 %v87, %v106
    %v108 = vmul.f32 %v93, %v106
    %v109 = vmul.f32 %v99, %v106
    %v110 = vmul.f32 %v105, %v106
    %111 = vmatprep.subr.mxu0 0.0
    %112 = vmatpush1.xpose.msra.mxu0 %v78
    %113 = vmatprep.subr.mxu0 0.0
    %114 = vmatpush1.xpose.msra.mxu0 0.0
    %115 = vmatprep.subr.mxu0 0.0
    %116 = vmatpush1.xpose.msra.mxu0 0.0
    %117 = vmatprep.subr.mxu0 0.0
    %118 = vmatpush1.xpose.msra.mxu0 0.0
    %119 = vmatprep.subr.mxu0 0.0
    %120 = vmatpush1.xpose.msra.mxu0 0.0
    %121 = vmatprep.subr.mxu0 0.0
    %122 = vmatpush1.xpose.msra.mxu0 0.0
    %123 = vmatprep.subr.mxu0 0.0
    %124 = vmatpush1.xpose.msra.mxu0 0.0
    %125 = vmatprep.subr.mxu0 0.0
    %126 = vmatpush1.xpose.msra.mxu0 0.0
    %127 = vmatprep.subr.mxu0 0.0
    %128 = vmatpush1.xpose.msra.mxu0 0.0
    %129 = vmatprep.subr.mxu0 0.0
    %130 = vmatpush1.xpose.msra.mxu0 0.0
    %131 = vmatprep.subr.mxu0 0.0
    %132 = vmatpush1.xpose.msra.mxu0 0.0
    %133 = vmatprep.subr.mxu0 0.0
    %134 = vmatpush1.xpose.msra.mxu0 0.0
    %135 = vmatprep.subr.mxu0 0.0
    %136 = vmatpush1.xpose.msra.mxu0 0.0
    %137 = vmatprep.subr.mxu0 0.0
    %138 = vmatpush1.xpose.msra.mxu0 0.0
    %139 = vmatprep.subr.mxu0 0.0
    %140 = vmatpush1.xpose.msra.mxu0 0.0
    %141 = vmatprep.subr.mxu0 0.0
    %142 = vmatpush1.xpose.msra.mxu0 0.0
    %143 = vmatprep.subr.mxu0 0.0
    %144 = vmatpush1.xpose.msra.mxu0 0.0
    %145 = vmatprep.subr.mxu0 0.0
    %146 = vmatpush1.xpose.msra.mxu0 0.0
    %147 = vmatprep.subr.mxu0 0.0
    %148 = vmatpush1.xpose.msra.mxu0 0.0
    %149 = vmatprep.subr.mxu0 0.0
    %150 = vmatpush1.xpose.msra.mxu0 0.0
    %151 = vmatprep.subr.mxu0 0.0
    %152 = vmatpush1.xpose.msra.mxu0 0.0
    %153 = vmatprep.subr.mxu0 0.0
    %154 = vmatpush1.xpose.msra.mxu0 0.0
    %155 = vmatprep.subr.mxu0 0.0
    %156 = vmatpush1.xpose.msra.mxu0 0.0
    %157 = vmatprep.subr.mxu0 0.0
    %158 = vmatpush1.xpose.msra.mxu0 0.0
    %159 = vmatprep.subr.mxu0 0.0
    %160 = vmatpush1.xpose.msra.mxu0 0.0
    %161 = vmatprep.subr.mxu0 0.0
    %162 = vmatpush1.xpose.msra.mxu0 0.0
    %163 = vmatprep.subr.mxu0 0.0
    %164 = vmatpush1.xpose.msra.mxu0 0.0
    %165 = vmatprep.subr.mxu0 0.0
    %166 = vmatpush1.xpose.msra.mxu0 0.0
    %167 = vmatprep.subr.mxu0 0.0
    %168 = vmatpush1.xpose.msra.mxu0 0.0
    %169 = vmatprep.subr.mxu0 0.0
    %170 = vmatpush1.xpose.msra.mxu0 0.0
    %171 = vmatprep.subr.mxu0 0.0
    %172 = vmatpush1.xpose.msra.mxu0 0.0
    %173 = vmatprep.subr.mxu0 0.0
    %174 = vmatpush1.xpose.msra.mxu0 0.0
    %175 = vmatprep.mubr.f32.mxu0 0.0
    %176 = vmatmul.mubr.f32.gmra.mrb[0].mxu0 %v107
    %v177 = vpop.f32.mrb[0].mxu0
    %v178 = vadd.f32 0.0, %v177
    %v179 = vpop.f32.mrb[0].mxu0
    %180 = vdwg.mxu0
    %181 = vmatprep.subr.mxu0 0.0
    %182 = vmatpush1.xpose.msra.mxu0 %v79
    %183 = vmatprep.subr.mxu0 0.0
    %184 = vmatpush1.xpose.msra.mxu0 0.0
    %185 = vmatprep.subr.mxu0 0.0
    %186 = vmatpush1.xpose.msra.mxu0 0.0
    %187 = vmatprep.subr.mxu0 0.0
    %188 = vmatpush1.xpose.msra.mxu0 0.0
    %189 = vmatprep.subr.mxu0 0.0
    %190 = vmatpush1.xpose.msra.mxu0 0.0
    %191 = vmatprep.subr.mxu0 0.0
    %192 = vmatpush1.xpose.msra.mxu0 0.0
    %193 = vmatprep.subr.mxu0 0.0
    %194 = vmatpush1.xpose.msra.mxu0 0.0
    %195 = vmatprep.subr.mxu0 0.0
    %196 = vmatpush1.xpose.msra.mxu0 0.0
    %197 = vmatprep.subr.mxu0 0.0
    %198 = vmatpush1.xpose.msra.mxu0 0.0
    %199 = vmatprep.subr.mxu0 0.0
    %200 = vmatpush1.xpose.msra.mxu0 0.0
    %201 = vmatprep.subr.mxu0 0.0
    %202 = vmatpush1.xpose.msra.mxu0 0.0
    %203 = vmatprep.subr.mxu0 0.0
    %204 = vmatpush1.xpose.msra.mxu0 0.0
    %205 = vmatprep.subr.mxu0 0.0
    %206 = vmatpush1.xpose.msra.mxu0 0.0
    %207 = vmatprep.subr.mxu0 0.0
    %208 = vmatpush1.xpose.msra.mxu0 0.0
    %209 = vmatprep.subr.mxu0 0.0
    %210 = vmatpush1.xpose.msra.mxu0 0.0
    %211 = vmatprep.subr.mxu0 0.0
    %212 = vmatpush1.xpose.msra.mxu0 0.0
    %213 = vmatprep.subr.mxu0 0.0
    %214 = vmatpush1.xpose.msra.mxu0 0.0
    %215 = vmatprep.subr.mxu0 0.0
    %216 = vmatpush1.xpose.msra.mxu0 0.0
    %217 = vmatprep.subr.mxu0 0.0
    %218 = vmatpush1.xpose.msra.mxu0 0.0
    %219 = vmatprep.subr.mxu0 0.0
    %220 = vmatpush1.xpose.msra.mxu0 0.0
    %221 = vmatprep.subr.mxu0 0.0
    %222 = vmatpush1.xpose.msra.mxu0 0.0
    %223 = vmatprep.subr.mxu0 0.0
    %224 = vmatpush1.xpose.msra.mxu0 0.0
    %225 = vmatprep.subr.mxu0 0.0
    %226 = vmatpush1.xpose.msra.mxu0 0.0
    %227 = vmatprep.subr.mxu0 0.0
    %228 = vmatpush1.xpose.msra.mxu0 0.0
    %229 = vmatprep.subr.mxu0 0.0
    %230 = vmatpush1.xpose.msra.mxu0 0.0
    %231 = vmatprep.subr.mxu0 0.0
    %232 = vmatpush1.xpose.msra.mxu0 0.0
    %233 = vmatprep.subr.mxu0 0.0
    %234 = vmatpush1.xpose.msra.mxu0 0.0
    %235 = vmatprep.subr.mxu0 0.0
    %236 = vmatpush1.xpose.msra.mxu0 0.0
    %237 = vmatprep.subr.mxu0 0.0
    %238 = vmatpush1.xpose.msra.mxu0 0.0
    %239 = vmatprep.subr.mxu0 0.0
    %240 = vmatpush1.xpose.msra.mxu0 0.0
    %241 = vmatprep.subr.mxu0 0.0
    %242 = vmatpush1.xpose.msra.mxu0 0.0
    %243 = vmatprep.subr.mxu0 0.0
    %244 = vmatpush1.xpose.msra.mxu0 0.0
    %245 = vmatprep.mubr.f32.mxu0 0.0
    %246 = vmatmul.mubr.f32.gmra.mrb[0].mxu0 %v108
    %v247 = vpop.f32.mrb[0].mxu0
    %v248 = vadd.f32 0.0, %v247
    %v249 = vpop.f32.mrb[0].mxu0
    %250 = vdwg.mxu0
    %251 = vmatprep.subr.mxu0 0.0
    %252 = vmatpush1.xpose.msra.mxu0 %v80
    %253 = vmatprep.subr.mxu0 0.0
    %254 = vmatpush1.xpose.msra.mxu0 0.0
    %255 = vmatprep.subr.mxu0 0.0
    %256 = vmatpush1.xpose.msra.mxu0 0.0
    %257 = vmatprep.subr.mxu0 0.0
    %258 = vmatpush1.xpose.msra.mxu0 0.0
    %259 = vmatprep.subr.mxu0 0.0
    %260 = vmatpush1.xpose.msra.mxu0 0.0
    %261 = vmatprep.subr.mxu0 0.0
    %262 = vmatpush1.xpose.msra.mxu0 0.0
    %263 = vmatprep.subr.mxu0 0.0
    %264 = vmatpush1.xpose.msra.mxu0 0.0
    %265 = vmatprep.subr.mxu0 0.0
    %266 = vmatpush1.xpose.msra.mxu0 0.0
    %267 = vmatprep.subr.mxu0 0.0
    %268 = vmatpush1.xpose.msra.mxu0 0.0
    %269 = vmatprep.subr.mxu0 0.0
    %270 = vmatpush1.xpose.msra.mxu0 0.0
    %271 = vmatprep.subr.mxu0 0.0
    %272 = vmatpush1.xpose.msra.mxu0 0.0
    %273 = vmatprep.subr.mxu0 0.0
    %274 = vmatpush1.xpose.msra.mxu0 0.0
    %275 = vmatprep.subr.mxu0 0.0
    %276 = vmatpush1.xpose.msra.mxu0 0.0
    %277 = vmatprep.subr.mxu0 0.0
    %278 = vmatpush1.xpose.msra.mxu0 0.0
    %279 = vmatprep.subr.mxu0 0.0
    %280 = vmatpush1.xpose.msra.mxu0 0.0
    %281 = vmatprep.subr.mxu0 0.0
    %282 = vmatpush1.xpose.msra.mxu0 0.0
    %283 = vmatprep.subr.mxu0 0.0
    %284 = vmatpush1.xpose.msra.mxu0 0.0
    %285 = vmatprep.subr.mxu0 0.0
    %286 = vmatpush1.xpose.msra.mxu0 0.0
    %287 = vmatprep.subr.mxu0 0.0
    %288 = vmatpush1.xpose.msra.mxu0 0.0
    %289 = vmatprep.subr.mxu0 0.0
    %290 = vmatpush1.xpose.msra.mxu0 0.0
    %291 = vmatprep.subr.mxu0 0.0
    %292 = vmatpush1.xpose.msra.mxu0 0.0
    %293 = vmatprep.subr.mxu0 0.0
    %294 = vmatpush1.xpose.msra.mxu0 0.0
    %295 = vmatprep.subr.mxu0 0.0
    %296 = vmatpush1.xpose.msra.mxu0 0.0
    %297 = vmatprep.subr.mxu0 0.0
    %298 = vmatpush1.xpose.msra.mxu0 0.0
    %299 = vmatprep.subr.mxu0 0.0
    %300 = vmatpush1.xpose.msra.mxu0 0.0
    %301 = vmatprep.subr.mxu0 0.0
    %302 = vmatpush1.xpose.msra.mxu0 0.0
    %303 = vmatprep.subr.mxu0 0.0
    %304 = vmatpush1.xpose.msra.mxu0 0.0
    %305 = vmatprep.subr.mxu0 0.0
    %306 = vmatpush1.xpose.msra.mxu0 0.0
    %307 = vmatprep.subr.mxu0 0.0
    %308 = vmatpush1.xpose.msra.mxu0 0.0
    %309 = vmatprep.subr.mxu0 0.0
    %310 = vmatpush1.xpose.msra.mxu0 0.0
    %311 = vmatprep.subr.mxu0 0.0
    %312 = vmatpush1.xpose.msra.mxu0 0.0
    %313 = vmatprep.subr.mxu0 0.0
    %314 = vmatpush1.xpose.msra.mxu0 0.0
    %315 = vmatprep.mubr.f32.mxu0 0.0
    %316 = vmatmul.mubr.f32.gmra.mrb[0].mxu0 %v109
    %v317 = vpop.f32.mrb[0].mxu0
    %v318 = vadd.f32 0.0, %v317
    %v319 = vpop.f32.mrb[0].mxu0
    %320 = vdwg.mxu0
    %321 = vmatprep.subr.mxu0 0.0
    %322 = vmatpush1.xpose.msra.mxu0 %v81
    %323 = vmatprep.subr.mxu0 0.0
    %324 = vmatpush1.xpose.msra.mxu0 0.0
    %325 = vmatprep.subr.mxu0 0.0
    %326 = vmatpush1.xpose.msra.mxu0 0.0
    %327 = vmatprep.subr.mxu0 0.0
    %328 = vmatpush1.xpose.msra.mxu0 0.0
    %329 = vmatprep.subr.mxu0 0.0
    %330 = vmatpush1.xpose.msra.mxu0 0.0
    %331 = vmatprep.subr.mxu0 0.0
    %332 = vmatpush1.xpose.msra.mxu0 0.0
    %333 = vmatprep.subr.mxu0 0.0
    %334 = vmatpush1.xpose.msra.mxu0 0.0
    %335 = vmatprep.subr.mxu0 0.0
    %336 = vmatpush1.xpose.msra.mxu0 0.0
    %337 = vmatprep.subr.mxu0 0.0
    %338 = vmatpush1.xpose.msra.mxu0 0.0
    %339 = vmatprep.subr.mxu0 0.0
    %340 = vmatpush1.xpose.msra.mxu0 0.0
    %341 = vmatprep.subr.mxu0 0.0
    %342 = vmatpush1.xpose.msra.mxu0 0.0
    %343 = vmatprep.subr.mxu0 0.0
    %344 = vmatpush1.xpose.msra.mxu0 0.0
    %345 = vmatprep.subr.mxu0 0.0
    %346 = vmatpush1.xpose.msra.mxu0 0.0
    %347 = vmatprep.subr.mxu0 0.0
    %348 = vmatpush1.xpose.msra.mxu0 0.0
    %349 = vmatprep.subr.mxu0 0.0
    %350 = vmatpush1.xpose.msra.mxu0 0.0
    %351 = vmatprep.subr.mxu0 0.0
    %352 = vmatpush1.xpose.msra.mxu0 0.0
    %353 = vmatprep.subr.mxu0 0.0
    %354 = vmatpush1.xpose.msra.mxu0 0.0
    %355 = vmatprep.subr.mxu0 0.0
    %356 = vmatpush1.xpose.msra.mxu0 0.0
    %357 = vmatprep.subr.mxu0 0.0
    %358 = vmatpush1.xpose.msra.mxu0 0.0
    %359 = vmatprep.subr.mxu0 0.0
    %360 = vmatpush1.xpose.msra.mxu0 0.0
    %361 = vmatprep.subr.mxu0 0.0
    %362 = vmatpush1.xpose.msra.mxu0 0.0
    %363 = vmatprep.subr.mxu0 0.0
    %364 = vmatpush1.xpose.msra.mxu0 0.0
    %365 = vmatprep.subr.mxu0 0.0
    %366 = vmatpush1.xpose.msra.mxu0 0.0
    %367 = vmatprep.subr.mxu0 0.0
    %368 = vmatpush1.xpose.msra.mxu0 0.0
    %369 = vmatprep.subr.mxu0 0.0
    %370 = vmatpush1.xpose.msra.mxu0 0.0
    %371 = vmatprep.subr.mxu0 0.0
    %372 = vmatpush1.xpose.msra.mxu0 0.0
    %373 = vmatprep.subr.mxu0 0.0
    %374 = vmatpush1.xpose.msra.mxu0 0.0
    %375 = vmatprep.subr.mxu0 0.0
    %376 = vmatpush1.xpose.msra.mxu0 0.0
    %377 = vmatprep.subr.mxu0 0.0
    %378 = vmatpush1.xpose.msra.mxu0 0.0
    %379 = vmatprep.subr.mxu0 0.0
    %380 = vmatpush1.xpose.msra.mxu0 0.0
    %381 = vmatprep.subr.mxu0 0.0
    %382 = vmatpush1.xpose.msra.mxu0 0.0
    %383 = vmatprep.subr.mxu0 0.0
    %384 = vmatpush1.xpose.msra.mxu0 0.0
    %385 = vmatprep.mubr.f32.mxu0 0.0
    %386 = vmatmul.mubr.f32.gmra.mrb[0].mxu0 %v110
    %v387 = vpop.f32.mrb[0].mxu0
    %v388 = vadd.f32 0.0, %v387
    %v389 = vpop.f32.mrb[0].mxu0
    %390 = vdwg.mxu0
    %v395 = vrot.slane %v248, 7
    %vm396 = vcmask 1041409
    %v397 = vsel %vm396, %v395, %v178
    %v398 = vrot.slane %v318, 6
    %vm399 = vcmask 1042434
    %v400 = vsel %vm399, %v398, %v397
    %v401 = vrot.slane %v388, 5
    %vm402 = vcmask 1043459
    %v403 = vsel %vm402, %v401, %v400
    %vm405 = vcmask 60416
    %v406 = vsel %vm405, %v403, -inf
    %407 = vmax.xlane.f32.xlu0 %v406
    %v408 = vpop.xlane.xlu0 %407
    %v410 = vrot.slane %v408, 1
    %v411 = vrot.slane %v408, 2
    %v412 = vrot.slane %v408, 3
    %v417 = vsub.f32 %v178, %v408
    %v418 = vsub.f32 %v248, %v410
    %v419 = vsub.f32 %v318, %v411
    %v420 = vsub.f32 %v388, %v412
    %v421 = vmul.f32 %v417, 1.442695
    %v422 = vpow.pop %v421
    %v423 = vmul.f32 %v418, 1.442695
    %v424 = vpow.pop %v423
    %v425 = vmul.f32 %v419, 1.442695
    %v426 = vpow.pop %v425
    %v427 = vmul.f32 %v420, 1.442695
    %v428 = vpow.pop %v427
    %v433 = vrot.slane %v424, 7
    %v434 = vsel %vm396, %v433, %v422
    %v435 = vrot.slane %v426, 6
    %v436 = vsel %vm399, %v435, %v434
    %v437 = vrot.slane %v428, 5
    %v438 = vsel %vm402, %v437, %v436
    %v440 = vsel %vm405, %v438, 0.0
    %441 = vadd.xlane.f32.xlu0 %v440
    %v442 = vpop.xlane.xlu0 %441
    %v443 = vrcp.pop %v442
    %v444 = vmul.f32 1.0, %v443
    %v446 = vrot.slane %v444, 1
    %v447 = vrot.slane %v444, 2
    %v448 = vrot.slane %v444, 3
    %v453 = vmul.f32 %v422, %v444
    %v454 = vmul.f32 %v424, %v446
    %v455 = vmul.f32 %v426, %v447
    %v456 = vmul.f32 %v428, %v448
    %v457 = vld [vmem:[#allocation2] sm:$0xf]
    %v458 = vld [vmem:[#allocation2 + $0x4] sm:$0xf]
    %v459 = vld [vmem:[#allocation2 + $0x8] sm:$0xf]
    %v460 = vld [vmem:[#allocation2 + $0xc] sm:$0xf]
    %v461 = vunpack.c.l.bf16 %v457
    %v462 = vunpack.c.l.bf16 %v458
    %v463 = vunpack.c.l.bf16 %v459
    %v464 = vunpack.c.l.bf16 %v460
    %vm465 = vcmask 64512
    %v467 = vsel %vm465, %v453, 0
    %469 = vmatprep.subr.mxu0 0.0
    %470 = vmatpush1.msra.mxu0 %v461
    %471 = vmatprep.subr.mxu0 0.0
    %472 = vmatpush1.msra.mxu0 0.0
    %473 = vmatprep.subr.mxu0 0.0
    %474 = vmatpush1.msra.mxu0 0.0
    %475 = vmatprep.subr.mxu0 0.0
    %476 = vmatpush1.msra.mxu0 0.0
    %477 = vmatprep.subr.mxu0 0.0
    %478 = vmatpush1.msra.mxu0 0.0
    %479 = vmatprep.subr.mxu0 0.0
    %480 = vmatpush1.msra.mxu0 0.0
    %481 = vmatprep.subr.mxu0 0.0
    %482 = vmatpush1.msra.mxu0 0.0
    %483 = vmatprep.subr.mxu0 0.0
    %484 = vmatpush1.msra.mxu0 0.0
    %485 = vmatprep.subr.mxu0 0.0
    %486 = vmatpush1.msra.mxu0 0.0
    %487 = vmatprep.subr.mxu0 0.0
    %488 = vmatpush1.msra.mxu0 0.0
    %489 = vmatprep.subr.mxu0 0.0
    %490 = vmatpush1.msra.mxu0 0.0
    %491 = vmatprep.subr.mxu0 0.0
    %492 = vmatpush1.msra.mxu0 0.0
    %493 = vmatprep.subr.mxu0 0.0
    %494 = vmatpush1.msra.mxu0 0.0
    %495 = vmatprep.subr.mxu0 0.0
    %496 = vmatpush1.msra.mxu0 0.0
    %497 = vmatprep.subr.mxu0 0.0
    %498 = vmatpush1.msra.mxu0 0.0
    %499 = vmatprep.subr.mxu0 0.0
    %500 = vmatpush1.msra.mxu0 0.0
    %501 = vmatprep.subr.mxu0 0.0
    %502 = vmatpush1.msra.mxu0 0.0
    %503 = vmatprep.subr.mxu0 0.0
    %504 = vmatpush1.msra.mxu0 0.0
    %505 = vmatprep.subr.mxu0 0.0
    %506 = vmatpush1.msra.mxu0 0.0
    %507 = vmatprep.subr.mxu0 0.0
    %508 = vmatpush1.msra.mxu0 0.0
    %509 = vmatprep.subr.mxu0 0.0
    %510 = vmatpush1.msra.mxu0 0.0
    %511 = vmatprep.subr.mxu0 0.0
    %512 = vmatpush1.msra.mxu0 0.0
    %513 = vmatprep.subr.mxu0 0.0
    %514 = vmatpush1.msra.mxu0 0.0
    %515 = vmatprep.subr.mxu0 0.0
    %516 = vmatpush1.msra.mxu0 0.0
    %517 = vmatprep.subr.mxu0 0.0
    %518 = vmatpush1.msra.mxu0 0.0
    %519 = vmatprep.subr.mxu0 0.0
    %520 = vmatpush1.msra.mxu0 0.0
    %521 = vmatprep.subr.mxu0 0.0
    %522 = vmatpush1.msra.mxu0 0.0
    %523 = vmatprep.subr.mxu0 0.0
    %524 = vmatpush1.msra.mxu0 0.0
    %525 = vmatprep.subr.mxu0 0.0
    %526 = vmatpush1.msra.mxu0 0.0
    %527 = vmatprep.subr.mxu0 0.0
    %528 = vmatpush1.msra.mxu0 0.0
    %529 = vmatprep.subr.mxu0 0.0
    %530 = vmatpush1.msra.mxu0 0.0
    %531 = vmatprep.subr.mxu0 0.0
    %532 = vmatpush1.msra.mxu0 0.0
    %533 = vmatprep.mubr.f32.mxu0 0.0
    %534 = vmatmul.mubr.f32.gmra.mrb[0].mxu0 %v467
    %v535 = vpop.f32.mrb[0].mxu0
    %v536 = vadd.f32 0.0, %v535
    %v537 = vpop.f32.mrb[0].mxu0
    %538 = vdwg.mxu0
    %v540 = vsel %vm465, %v454, 0
    %542 = vmatprep.subr.mxu0 0.0
    %543 = vmatpush1.msra.mxu0 %v462
    %544 = vmatprep.subr.mxu0 0.0
    %545 = vmatpush1.msra.mxu0 0.0
    %546 = vmatprep.subr.mxu0 0.0
    %547 = vmatpush1.msra.mxu0 0.0
    %548 = vmatprep.subr.mxu0 0.0
    %549 = vmatpush1.msra.mxu0 0.0
    %550 = vmatprep.subr.mxu0 0.0
    %551 = vmatpush1.msra.mxu0 0.0
    %552 = vmatprep.subr.mxu0 0.0
    %553 = vmatpush1.msra.mxu0 0.0
    %554 = vmatprep.subr.mxu0 0.0
    %555 = vmatpush1.msra.mxu0 0.0
    %556 = vmatprep.subr.mxu0 0.0
    %557 = vmatpush1.msra.mxu0 0.0
    %558 = vmatprep.subr.mxu0 0.0
    %559 = vmatpush1.msra.mxu0 0.0
    %560 = vmatprep.subr.mxu0 0.0
    %561 = vmatpush1.msra.mxu0 0.0
    %562 = vmatprep.subr.mxu0 0.0
    %563 = vmatpush1.msra.mxu0 0.0
    %564 = vmatprep.subr.mxu0 0.0
    %565 = vmatpush1.msra.mxu0 0.0
    %566 = vmatprep.subr.mxu0 0.0
    %567 = vmatpush1.msra.mxu0 0.0
    %568 = vmatprep.subr.mxu0 0.0
    %569 = vmatpush1.msra.mxu0 0.0
    %570 = vmatprep.subr.mxu0 0.0
    %571 = vmatpush1.msra.mxu0 0.0
    %572 = vmatprep.subr.mxu0 0.0
    %573 = vmatpush1.msra.mxu0 0.0
    %574 = vmatprep.subr.mxu0 0.0
    %575 = vmatpush1.msra.mxu0 0.0
    %576 = vmatprep.subr.mxu0 0.0
    %577 = vmatpush1.msra.mxu0 0.0
    %578 = vmatprep.subr.mxu0 0.0
    %579 = vmatpush1.msra.mxu0 0.0
    %580 = vmatprep.subr.mxu0 0.0
    %581 = vmatpush1.msra.mxu0 0.0
    %582 = vmatprep.subr.mxu0 0.0
    %583 = vmatpush1.msra.mxu0 0.0
    %584 = vmatprep.subr.mxu0 0.0
    %585 = vmatpush1.msra.mxu0 0.0
    %586 = vmatprep.subr.mxu0 0.0
    %587 = vmatpush1.msra.mxu0 0.0
    %588 = vmatprep.subr.mxu0 0.0
    %589 = vmatpush1.msra.mxu0 0.0
    %590 = vmatprep.subr.mxu0 0.0
    %591 = vmatpush1.msra.mxu0 0.0
    %592 = vmatprep.subr.mxu0 0.0
    %593 = vmatpush1.msra.mxu0 0.0
    %594 = vmatprep.subr.mxu0 0.0
    %595 = vmatpush1.msra.mxu0 0.0
    %596 = vmatprep.subr.mxu0 0.0
    %597 = vmatpush1.msra.mxu0 0.0
    %598 = vmatprep.subr.mxu0 0.0
    %599 = vmatpush1.msra.mxu0 0.0
    %600 = vmatprep.subr.mxu0 0.0
    %601 = vmatpush1.msra.mxu0 0.0
    %602 = vmatprep.subr.mxu0 0.0
    %603 = vmatpush1.msra.mxu0 0.0
    %604 = vmatprep.subr.mxu0 0.0
    %605 = vmatpush1.msra.mxu0 0.0
    %606 = vmatprep.mubr.f32.mxu0 0.0
    %607 = vmatmul.mubr.f32.gmra.mrb[0].mxu0 %v540
    %v608 = vpop.f32.mrb[0].mxu0
    %v609 = vadd.f32 0.0, %v608
    %v610 = vpop.f32.mrb[0].mxu0
    %611 = vdwg.mxu0
    %v613 = vsel %vm465, %v455, 0
    %615 = vmatprep.subr.mxu0 0.0
    %616 = vmatpush1.msra.mxu0 %v463
    %617 = vmatprep.subr.mxu0 0.0
    %618 = vmatpush1.msra.mxu0 0.0
    %619 = vmatprep.subr.mxu0 0.0
    %620 = vmatpush1.msra.mxu0 0.0
    %621 = vmatprep.subr.mxu0 0.0
    %622 = vmatpush1.msra.mxu0 0.0
    %623 = vmatprep.subr.mxu0 0.0
    %624 = vmatpush1.msra.mxu0 0.0
    %625 = vmatprep.subr.mxu0 0.0
    %626 = vmatpush1.msra.mxu0 0.0
    %627 = vmatprep.subr.mxu0 0.0
    %628 = vmatpush1.msra.mxu0 0.0
    %629 = vmatprep.subr.mxu0 0.0
    %630 = vmatpush1.msra.mxu0 0.0
    %631 = vmatprep.subr.mxu0 0.0
    %632 = vmatpush1.msra.mxu0 0.0
    %633 = vmatprep.subr.mxu0 0.0
    %634 = vmatpush1.msra.mxu0 0.0
    %635 = vmatprep.subr.mxu0 0.0
    %636 = vmatpush1.msra.mxu0 0.0
    %637 = vmatprep.subr.mxu0 0.0
    %638 = vmatpush1.msra.mxu0 0.0
    %639 = vmatprep.subr.mxu0 0.0
    %640 = vmatpush1.msra.mxu0 0.0
    %641 = vmatprep.subr.mxu0 0.0
    %642 = vmatpush1.msra.mxu0 0.0
    %643 = vmatprep.subr.mxu0 0.0
    %644 = vmatpush1.msra.mxu0 0.0
    %645 = vmatprep.subr.mxu0 0.0
    %646 = vmatpush1.msra.mxu0 0.0
    %647 = vmatprep.subr.mxu0 0.0
    %648 = vmatpush1.msra.mxu0 0.0
    %649 = vmatprep.subr.mxu0 0.0
    %650 = vmatpush1.msra.mxu0 0.0
    %651 = vmatprep.subr.mxu0 0.0
    %652 = vmatpush1.msra.mxu0 0.0
    %653 = vmatprep.subr.mxu0 0.0
    %654 = vmatpush1.msra.mxu0 0.0
    %655 = vmatprep.subr.mxu0 0.0
    %656 = vmatpush1.msra.mxu0 0.0
    %657 = vmatprep.subr.mxu0 0.0
    %658 = vmatpush1.msra.mxu0 0.0
    %659 = vmatprep.subr.mxu0 0.0
    %660 = vmatpush1.msra.mxu0 0.0
    %661 = vmatprep.subr.mxu0 0.0
    %662 = vmatpush1.msra.mxu0 0.0
    %663 = vmatprep.subr.mxu0 0.0
    %664 = vmatpush1.msra.mxu0 0.0
    %665 = vmatprep.subr.mxu0 0.0
    %666 = vmatpush1.msra.mxu0 0.0
    %667 = vmatprep.subr.mxu0 0.0
    %668 = vmatpush1.msra.mxu0 0.0
    %669 = vmatprep.subr.mxu0 0.0
    %670 = vmatpush1.msra.mxu0 0.0
    %671 = vmatprep.subr.mxu0 0.0
    %672 = vmatpush1.msra.mxu0 0.0
    %673 = vmatprep.subr.mxu0 0.0
    %674 = vmatpush1.msra.mxu0 0.0
    %675 = vmatprep.subr.mxu0 0.0
    %676 = vmatpush1.msra.mxu0 0.0
    %677 = vmatprep.subr.mxu0 0.0
    %678 = vmatpush1.msra.mxu0 0.0
    %679 = vmatprep.mubr.f32.mxu0 0.0
    %680 = vmatmul.mubr.f32.gmra.mrb[0].mxu0 %v613
    %v681 = vpop.f32.mrb[0].mxu0
    %v682 = vadd.f32 0.0, %v681
    %v683 = vpop.f32.mrb[0].mxu0
    %684 = vdwg.mxu0
    %v686 = vsel %vm465, %v456, 0
    %688 = vmatprep.subr.mxu0 0.0
    %689 = vmatpush1.msra.mxu0 %v464
    %690 = vmatprep.subr.mxu0 0.0
    %691 = vmatpush1.msra.mxu0 0.0
    %692 = vmatprep.subr.mxu0 0.0
    %693 = vmatpush1.msra.mxu0 0.0
    %694 = vmatprep.subr.mxu0 0.0
    %695 = vmatpush1.msra.mxu0 0.0
    %696 = vmatprep.subr.mxu0 0.0
    %697 = vmatpush1.msra.mxu0 0.0
    %698 = vmatprep.subr.mxu0 0.0
    %699 = vmatpush1.msra.mxu0 0.0
    %700 = vmatprep.subr.mxu0 0.0
    %701 = vmatpush1.msra.mxu0 0.0
    %702 = vmatprep.subr.mxu0 0.0
    %703 = vmatpush1.msra.mxu0 0.0
    %704 = vmatprep.subr.mxu0 0.0
    %705 = vmatpush1.msra.mxu0 0.0
    %706 = vmatprep.subr.mxu0 0.0
    %707 = vmatpush1.msra.mxu0 0.0
    %708 = vmatprep.subr.mxu0 0.0
    %709 = vmatpush1.msra.mxu0 0.0
    %710 = vmatprep.subr.mxu0 0.0
    %711 = vmatpush1.msra.mxu0 0.0
    %712 = vmatprep.subr.mxu0 0.0
    %713 = vmatpush1.msra.mxu0 0.0
    %714 = vmatprep.subr.mxu0 0.0
    %715 = vmatpush1.msra.mxu0 0.0
    %716 = vmatprep.subr.mxu0 0.0
    %717 = vmatpush1.msra.mxu0 0.0
    %718 = vmatprep.subr.mxu0 0.0
    %719 = vmatpush1.msra.mxu0 0.0
    %720 = vmatprep.subr.mxu0 0.0
    %721 = vmatpush1.msra.mxu0 0.0
    %722 = vmatprep.subr.mxu0 0.0
    %723 = vmatpush1.msra.mxu0 0.0
    %724 = vmatprep.subr.mxu0 0.0
    %725 = vmatpush1.msra.mxu0 0.0
    %726 = vmatprep.subr.mxu0 0.0
    %727 = vmatpush1.msra.mxu0 0.0
    %728 = vmatprep.subr.mxu0 0.0
    %729 = vmatpush1.msra.mxu0 0.0
    %730 = vmatprep.subr.mxu0 0.0
    %731 = vmatpush1.msra.mxu0 0.0
    %732 = vmatprep.subr.mxu0 0.0
    %733 = vmatpush1.msra.mxu0 0.0
    %734 = vmatprep.subr.mxu0 0.0
    %735 = vmatpush1.msra.mxu0 0.0
    %736 = vmatprep.subr.mxu0 0.0
    %737 = vmatpush1.msra.mxu0 0.0
    %738 = vmatprep.subr.mxu0 0.0
    %739 = vmatpush1.msra.mxu0 0.0
    %740 = vmatprep.subr.mxu0 0.0
    %741 = vmatpush1.msra.mxu0 0.0
    %742 = vmatprep.subr.mxu0 0.0
    %743 = vmatpush1.msra.mxu0 0.0
    %744 = vmatprep.subr.mxu0 0.0
    %745 = vmatpush1.msra.mxu0 0.0
    %746 = vmatprep.subr.mxu0 0.0
    %747 = vmatpush1.msra.mxu0 0.0
    %748 = vmatprep.subr.mxu0 0.0
    %749 = vmatpush1.msra.mxu0 0.0
    %750 = vmatprep.subr.mxu0 0.0
    %751 = vmatpush1.msra.mxu0 0.0
    %752 = vmatprep.mubr.f32.mxu0 0.0
    %753 = vmatmul.mubr.f32.gmra.mrb[0].mxu0 %v686
    %v754 = vpop.f32.mrb[0].mxu0
    %v755 = vadd.f32 0.0, %v754
    %v756 = vpop.f32.mrb[0].mxu0
    %757 = vdwg.mxu0
    %v762 = vrot.slane %v609, 7
    %v763 = vsel %vm396, %v762, %v536
    %v764 = vrot.slane %v682, 6
    %v765 = vsel %vm399, %v764, %v763
    %v766 = vrot.slane %v755, 5
    %v767 = vsel %vm402, %v766, %v765
    %769 = vst [vmem:[#allocation10] sm:$0xf] %v767
    %v770 = vld [vmem:[#allocation7] sm:$0xf]
    %v771 = vld [vmem:[#allocation7 + $0x4] sm:$0xf]
    %v772 = vld [vmem:[#allocation7 + $0x8] sm:$0xf]
    %v773 = vld [vmem:[#allocation7 + $0xc] sm:$0xf]
    %v774 = vld [vmem:[#allocation7 + $0x10] sm:$0xf]
    %v775 = vld [vmem:[#allocation7 + $0x14] sm:$0xf]
    %v776 = vld [vmem:[#allocation7 + $0x18] sm:$0xf]
    %v777 = vld [vmem:[#allocation7 + $0x1c] sm:$0xf]
    %v778 = vld [vmem:[#allocation7 + $0x20] sm:$0xf]
    %v779 = vld [vmem:[#allocation7 + $0x24] sm:$0xf]
    %v780 = vld [vmem:[#allocation7 + $0x28] sm:$0xf]
    %v781 = vld [vmem:[#allocation7 + $0x2c] sm:$0xf]
    %v782 = vld [vmem:[#allocation7 + $0x30] sm:$0xf]
    %v783 = vld [vmem:[#allocation7 + $0x34] sm:$0xf]
    %v784 = vld [vmem:[#allocation7 + $0x38] sm:$0xf]
    %v785 = vld [vmem:[#allocation7 + $0x3c] sm:$0xf]
    %v786 = vunpack.c.l.bf16 %v770
    %v787 = vunpack.c.l.bf16 %v771
    %v788 = vunpack.c.l.bf16 %v772
    %v789 = vunpack.c.l.bf16 %v773
    %v790 = vunpack.c.l.bf16 %v774
    %v791 = vunpack.c.l.bf16 %v775
    %v792 = vunpack.c.l.bf16 %v776
    %v793 = vunpack.c.l.bf16 %v777
    %v794 = vunpack.c.l.bf16 %v778
    %v795 = vunpack.c.l.bf16 %v779
    %v796 = vunpack.c.l.bf16 %v780
    %v797 = vunpack.c.l.bf16 %v781
    %v798 = vunpack.c.l.bf16 %v782
    %v799 = vunpack.c.l.bf16 %v783
    %v800 = vunpack.c.l.bf16 %v784
    %v801 = vunpack.c.l.bf16 %v785
    %v802 = vld [vmem:[#allocation8] sm:$0x1]
    %v804 = vlaneseq
    %v805 = vshrl.u32 %v804, 7
    %v806 = vsub.s32 0, %v805
    %v807 = vrot.slane %v802, %v806
    %809 = vmatprep.subr.mxu0 0.0
    %810 = vmatpush1.msra.mxu0 %v786
    %811 = vmatprep.subr.mxu0 0.0
    %812 = vmatpush1.msra.mxu0 %v787
    %813 = vmatprep.subr.mxu0 0.0
    %814 = vmatpush1.msra.mxu0 %v788
    %815 = vmatprep.subr.mxu0 0.0
    %816 = vmatpush1.msra.mxu0 %v789
    %817 = vmatprep.subr.mxu0 0.0
    %818 = vmatpush1.msra.mxu0 %v790
    %819 = vmatprep.subr.mxu0 0.0
    %820 = vmatpush1.msra.mxu0 %v791
    %821 = vmatprep.subr.mxu0 0.0
    %822 = vmatpush1.msra.mxu0 %v792
    %823 = vmatprep.subr.mxu0 0.0
    %824 = vmatpush1.msra.mxu0 %v793
    %825 = vmatprep.subr.mxu0 0.0
    %826 = vmatpush1.msra.mxu0 %v794
    %827 = vmatprep.subr.mxu0 0.0
    %828 = vmatpush1.msra.mxu0 %v795
    %829 = vmatprep.subr.mxu0 0.0
    %830 = vmatpush1.msra.mxu0 %v796
    %831 = vmatprep.subr.mxu0 0.0
    %832 = vmatpush1.msra.mxu0 %v797
    %833 = vmatprep.subr.mxu0 0.0
    %834 = vmatpush1.msra.mxu0 %v798
    %835 = vmatprep.subr.mxu0 0.0
    %836 = vmatpush1.msra.mxu0 %v799
    %837 = vmatprep.subr.mxu0 0.0
    %838 = vmatpush1.msra.mxu0 %v800
    %839 = vmatprep.subr.mxu0 0.0
    %840 = vmatpush1.msra.mxu0 %v801
    %841 = vmatprep.subr.mxu0 0.0
    %842 = vmatpush1.msra.mxu0 0.0
    %843 = vmatprep.subr.mxu0 0.0
    %844 = vmatpush1.msra.mxu0 0.0
    %845 = vmatprep.subr.mxu0 0.0
    %846 = vmatpush1.msra.mxu0 0.0
    %847 = vmatprep.subr.mxu0 0.0
    %848 = vmatpush1.msra.mxu0 0.0
    %849 = vmatprep.subr.mxu0 0.0
    %850 = vmatpush1.msra.mxu0 0.0
    %851 = vmatprep.subr.mxu0 0.0
    %852 = vmatpush1.msra.mxu0 0.0
    %853 = vmatprep.subr.mxu0 0.0
    %854 = vmatpush1.msra.mxu0 0.0
    %855 = vmatprep.subr.mxu0 0.0
    %856 = vmatpush1.msra.mxu0 0.0
    %857 = vmatprep.subr.mxu0 0.0
    %858 = vmatpush1.msra.mxu0 0.0
    %859 = vmatprep.subr.mxu0 0.0
    %860 = vmatpush1.msra.mxu0 0.0
    %861 = vmatprep.subr.mxu0 0.0
    %862 = vmatpush1.msra.mxu0 0.0
    %863 = vmatprep.subr.mxu0 0.0
    %864 = vmatpush1.msra.mxu0 0.0
    %865 = vmatprep.subr.mxu0 0.0
    %866 = vmatpush1.msra.mxu0 0.0
    %867 = vmatprep.subr.mxu0 0.0
    %868 = vmatpush1.msra.mxu0 0.0
    %869 = vmatprep.subr.mxu0 0.0
    %870 = vmatpush1.msra.mxu0 0.0
    %871 = vmatprep.subr.mxu0 0.0
    %872 = vmatpush1.msra.mxu0 0.0
    %873 = vmatprep.mubr.f32.mxu0 0.0
    %874 = vmatmul.mubr.f32.gmra.mrb[0].mxu0 %v767
    %v875 = vpop.f32.mrb[0].mxu0
    %v876 = vadd.f32 %v807, %v875
    %v877 = vpop.f32.mrb[0].mxu0
    %878 = vdwg.mxu0
    %v879 = vpack.c.bf16 %v876, %v876
    %880 = vst [vmem:[#allocation11] sm:$0x3] %v879
    // Predicated region
    $region34: #{attmodule_dir_forward.5} parent=1 // pred_check
      _
    $region35: #{attmodule_dir_forward.5} parent=1 // pred_check_branch
      %882 = sbr.rel (0) target = $region37
    $region36: #{attmodule_dir_forward.5} parent=1 // pred_region
      %s884 = ssub.s32 64, 64
      %885 = vsyncadd [#allocation4], %s884
      %s887 = sshll.u32 [#allocation10], 4
      %s888 = int_to_ptr.vmem [resolvable:$true] %s887
      %890 = dma.vmem_to_hbm [thread:$0]  %s888, 64, %s4, [#allocation4]
    $region37: #{attmodule_dir_forward.5} parent=1 // pred_fallthru
      _
    // Predicated region
    $region38: #{attmodule_dir_forward.5} parent=1 // pred_check
      _
    $region39: #{attmodule_dir_forward.5} parent=1 // pred_check_branch
      %892 = sbr.rel (0) target = $region41
    $region40: #{attmodule_dir_forward.5} parent=1 // pred_region
      %s894 = ssub.s32 32, 32
      %895 = vsyncadd [#allocation12], %s894
      %s897 = sshll.u32 [#allocation11], 4
      %s898 = int_to_ptr.vmem [resolvable:$true] %s897
      %900 = dma.vmem_to_hbm [thread:$0]  %s898, 32, %s5, [#allocation12]
    $region41: #{attmodule_dir_forward.5} parent=1 // pred_fallthru
      _
    // Predicated region
    $region42: #{attmodule_dir_forward.5} parent=1 // pred_check
      _
    $region43: #{attmodule_dir_forward.5} parent=1 // pred_check_branch
      %902 = sbr.rel (0) target = $region45
    $region44: #{attmodule_dir_forward.5} parent=1 // pred_region
      %903 = dma.done [#allocation4], 64
    $region45: #{attmodule_dir_forward.5} parent=1 // pred_fallthru
      _
    // Predicated region
    $region46: #{attmodule_dir_forward.5} parent=1 // pred_check
      _
    $region47: #{attmodule_dir_forward.5} parent=1 // pred_check_branch
      %905 = sbr.rel (0) target = $region49
    $region48: #{attmodule_dir_forward.5} parent=1 // pred_region
      %906 = dma.done [#allocation12], 32
    $region49: #{attmodule_dir_forward.5} parent=1 // pred_fallthru
      _
    %907 = vsyncpa [#allocation3], 1
    %908 = vsyncpa [#allocation6], 1
    %909 = vsyncpa [#allocation9], 1
    %910 = vsyncpa [#allocation4], 1
    %911 = vsyncpa [#allocation12], 1

</llo_original>
